<compile_context>
chip_gen: v7x
topology: tpu7x:2x2x1
jax: 0.10.0
libtpu: 0.0.40
codegen_flags: <defaults>
</compile_context>

<pallas_src>
import jax
import jax.numpy as jnp
from jax import lax
from jax.experimental import pallas as pl
from jax.experimental.pallas import tpu as pltpu

N_EMBD = 30
NUM_HEADS = 6
HEAD_SIZE = N_EMBD // NUM_HEADS   # 5
HHS = NUM_HEADS * HEAD_SIZE       # 30


def mha_kernel(x_ref, wqkv_ref, wp_ref, bp_ref, o_ref):
    # x_ref:    (B, T, C)     all batch elements in one kernel invocation
    # wqkv_ref: (C, 3*H*hs)   packed [Wq * C**-0.5 | Wk | Wv]   (bf16)
    # wp_ref:   (C, C)        output projection (in, out)        (bf16)
    # bp_ref:   (1, C)        output projection bias             (f32)
    # o_ref:    (B, T, C)
    B, T, C = x_ref.shape

    # Layout-trivial collapse (B, T, C) -> (B*T, C); bf16 for native MXU input.
    x2d = x_ref[...].reshape(B * T, C).astype(jnp.bfloat16)

    # One MXU matmul for the whole QKV projection; f32 accumulation.
    qkv = jnp.dot(x2d, wqkv_ref[...], preferred_element_type=jnp.float32)  # (B*T, 3*HHS)
    qkv = qkv.astype(jnp.bfloat16)

    def split_heads(m2d):
        # (B*T, H*hs) -> (B*H, T, hs): one reshape + one transpose per tensor.
        return (m2d.reshape(B, T, NUM_HEADS, HEAD_SIZE)
                    .transpose(0, 2, 1, 3)
                    .reshape(B * NUM_HEADS, T, HEAD_SIZE))

    q = split_heads(qkv[:, :HHS])
    k = split_heads(qkv[:, HHS:2 * HHS])
    v = split_heads(qkv[:, 2 * HHS:])

    # Causal (tril) mask shared by every (batch, head): keep query i >= key j.
    row = lax.broadcasted_iota(jnp.int32, (T, T), 0)
    col = lax.broadcasted_iota(jnp.int32, (T, T), 1)
    causal = (row >= col)[None, :, :]

    # Scores; the C**-0.5 scale is already folded into the Q weights offline.
    scores = jnp.einsum('gqd,gkd->gqk', q, k, preferred_element_type=jnp.float32)
    scores = jnp.where(causal, scores, jnp.float32(-jnp.inf))

    # Reference quirk: F.softmax(..., dim=1) on (B, T, T) == softmax over the
    # QUERY axis (axis 1 of (g, q, k) here).  EUP reciprocal keeps VALU clear.
    m = jnp.max(scores, axis=1, keepdims=True)
    e = jnp.exp(scores - m)
    p = e * pl.reciprocal(jnp.sum(e, axis=1, keepdims=True), approx=True)

    att = jnp.einsum('gqk,gkd->gqd', p.astype(jnp.bfloat16), v,
                     preferred_element_type=jnp.float32)            # (B*H, T, hs)

    # Re-merge heads: (B*H, T, hs) -> (B*T, C) with a single transpose.
    att2d = (att.astype(jnp.bfloat16)
                .reshape(B, NUM_HEADS, T, HEAD_SIZE)
                .transpose(0, 2, 1, 3)
                .reshape(B * T, C))

    y = jnp.dot(att2d, wp_ref[...], preferred_element_type=jnp.float32) + bp_ref[...]
    o_ref[...] = y.reshape(B, T, C).astype(o_ref.dtype)


def pack_qkv_weights(wq, wk, wv, n_embd=N_EMBD):
    """Pack [Wq, Wk, Wv] into one (C, 3*H*hs) bf16 matrix, folding the
    reference's C**-0.5 attention-score scale into the query projection
    (done once, offline w.r.t. the kernel call)."""
    scale = float(n_embd) ** -0.5
    return jnp.concatenate([wq * scale, wk, wv], axis=1).astype(jnp.bfloat16)


def multihead_attention(x, wqkv, wp, bp):
    B, T, C = x.shape
    G = B * NUM_HEADS
    wp_b = wp.astype(jnp.bfloat16)

    flops = (2 * B * T * C * (3 * HHS)           # QKV projection
             + 2 * 2 * G * T * T * HEAD_SIZE     # scores + attention @ V
             + 2 * B * T * C * C)                # output projection
    bytes_accessed = (x.size * x.dtype.itemsize
                      + wqkv.size * wqkv.dtype.itemsize
                      + wp_b.size * wp_b.dtype.itemsize
                      + bp.size * bp.dtype.itemsize
                      + B * T * C * x.dtype.itemsize)

    return pl.pallas_call(
        mha_kernel,
        out_shape=jax.ShapeDtypeStruct((B, T, C), x.dtype),
        grid=(1,),   # single grid step: working set is a few KB of VMEM
        in_specs=[
            pl.BlockSpec((B, T, C), lambda i: (0, 0, 0)),
            pl.BlockSpec((C, 3 * HHS), lambda i: (0, 0)),
            pl.BlockSpec((C, C), lambda i: (0, 0)),
            pl.BlockSpec((1, C), lambda i: (0, 0)),
        ],
        out_specs=pl.BlockSpec((B, T, C), lambda i: (0, 0, 0)),
        cost_estimate=pl.CostEstimate(flops=flops,
                                      transcendentals=G * T * T,
                                      bytes_accessed=bytes_accessed),
    )(x, wqkv, wp_b, bp)


def mha_reference(x, wq, wk, wv, wp, bp):
    """Pure-JAX mirror of the PyTorch MultiHead_Attention forward (eval mode)."""
    B, T, C = x.shape
    tril = jnp.tril(jnp.ones((T, T), dtype=bool))
    head_outs = []
    for h in range(NUM_HEADS):
        sl = slice(h * HEAD_SIZE, (h + 1) * HEAD_SIZE)
        qh = x @ wq[:, sl]
        kh = x @ wk[:, sl]
        vh = x @ wv[:, sl]
        s = jnp.einsum('bqd,bkd->bqk', qh, kh) * (C ** -0.5)
        s = jnp.where(tril[None], s, -jnp.inf)
        p = jax.nn.softmax(s, axis=1)   # reference quirk: softmax over query axis
        head_outs.append(jnp.einsum('bqk,bkd->bqd', p, vh))
    out = jnp.concatenate(head_outs, axis=-1)
    return out @ wp + bp[0]


if __name__ == "__main__":
    key = jax.random.PRNGKey(0)
    ks = jax.random.split(key, 6)

    B, T = 2, 8  # small sequence; n_embd fixed at 30 by the module
    x = jax.random.normal(ks[0], (B, T, N_EMBD), dtype=jnp.float32)

    # Deterministic parameter init mimicking nn.Linear's uniform(-1/sqrt(in), 1/sqrt(in)).
    bound = 1.0 / (N_EMBD ** 0.5)
    wq = jax.random.uniform(ks[1], (N_EMBD, HHS), jnp.float32, -bound, bound)
    wk = jax.random.uniform(ks[2], (N_EMBD, HHS), jnp.float32, -bound, bound)
    wv = jax.random.uniform(ks[3], (N_EMBD, HHS), jnp.float32, -bound, bound)
    wp = jax.random.uniform(ks[4], (N_EMBD, N_EMBD), jnp.float32, -bound, bound)
    bp = jax.random.uniform(ks[5], (1, N_EMBD), jnp.float32, -bound, bound)

    wqkv = pack_qkv_weights(wq, wk, wv)        # offline packing + scale folding (bf16)

    out = multihead_attention(x, wqkv, wp, bp)
    jax.block_until_ready(out)
    assert out.shape == (B, T, N_EMBD)

    ref = mha_reference(x, wq, wk, wv, wp, bp)
    assert jnp.allclose(out, ref, rtol=2e-2, atol=2e-2), float(jnp.max(jnp.abs(out - ref)))
    print("KERNEL_OK")
</pallas_src>

<mosaic_0001>
module attributes {stable_mosaic.version = 11 : i64} {
  func.func @mha_kernel(%arg0: i32, %arg1: memref<2x8x30xf32, #tpu.memory_space<vmem>>, %arg2: memref<30x90xbf16, #tpu.memory_space<vmem>>, %arg3: memref<30x30xbf16, #tpu.memory_space<vmem>>, %arg4: memref<1x30xf32, #tpu.memory_space<vmem>>, %arg5: memref<2x8x30xf32, #tpu.memory_space<vmem>>) attributes {dimension_semantics = [#tpu.dimension_semantics<arbitrary>], iteration_bounds = array<i64: 1>, scalar_prefetch = 0 : i64, scratch_operands = 0 : i64, tpu.core_type = #tpu.core_type<tc>, window_params = [{pipeline_mode = #tpu.pipeline_mode<synchronous>, transform_indices = @transform_0, window_bounds = array<i64: 2, 8, 30>}, {pipeline_mode = #tpu.pipeline_mode<synchronous>, transform_indices = @transform_1, window_bounds = array<i64: 30, 90>}, {pipeline_mode = #tpu.pipeline_mode<synchronous>, transform_indices = @transform_2, window_bounds = array<i64: 30, 30>}, {pipeline_mode = #tpu.pipeline_mode<synchronous>, transform_indices = @transform_3, window_bounds = array<i64: 1, 30>}, {pipeline_mode = #tpu.pipeline_mode<synchronous>, transform_indices = @transform_4, window_bounds = array<i64: 2, 8, 30>}]} {
    %c0 = arith.constant 0 : index
    %c0_0 = arith.constant 0 : index
    %c0_1 = arith.constant 0 : index
    %0 = vector.load %arg1[%c0, %c0_0, %c0_1] : memref<2x8x30xf32, #tpu.memory_space<vmem>>, vector<2x8x30xf32>
    %1 = vector.shape_cast %0 : vector<2x8x30xf32> to vector<16x30xf32>
    %2 = arith.truncf %1 : vector<16x30xf32> to vector<16x30xbf16>
    %c0_2 = arith.constant 0 : index
    %c0_3 = arith.constant 0 : index
    %3 = vector.load %arg2[%c0_2, %c0_3] : memref<30x90xbf16, #tpu.memory_space<vmem>>, vector<30x90xbf16>
    %cst = arith.constant dense<0.000000e+00> : vector<16x90xf32>
    %4 = tpu.matmul %2, %3, %cst {dimension_numbers = #tpu.dot_dimension_numbers<[1], [0], [0], [1], [0, 0, 1, 1], [], []>} : vector<16x30xbf16>, vector<30x90xbf16>, vector<16x90xf32> -> vector<16x90xf32>
    %5 = arith.truncf %4 : vector<16x90xf32> to vector<16x90xbf16>
    %6 = vector.extract_strided_slice %5 {offsets = [0, 0], sizes = [16, 30], strides = [1, 1]} : vector<16x90xbf16> to vector<16x30xbf16>
    %7 = vector.shape_cast %6 : vector<16x30xbf16> to vector<2x8x6x5xbf16>
    %8 = tpu.transpose %7, [0, 2, 1, 3] : vector<2x8x6x5xbf16> -> vector<2x6x8x5xbf16>
    %9 = vector.shape_cast %8 : vector<2x6x8x5xbf16> to vector<12x8x5xbf16>
    %10 = vector.extract_strided_slice %5 {offsets = [0, 30], sizes = [16, 30], strides = [1, 1]} : vector<16x90xbf16> to vector<16x30xbf16>
    %11 = vector.shape_cast %10 : vector<16x30xbf16> to vector<2x8x6x5xbf16>
    %12 = tpu.transpose %11, [0, 2, 1, 3] : vector<2x8x6x5xbf16> -> vector<2x6x8x5xbf16>
    %13 = vector.shape_cast %12 : vector<2x6x8x5xbf16> to vector<12x8x5xbf16>
    %14 = vector.extract_strided_slice %5 {offsets = [0, 60], sizes = [16, 30], strides = [1, 1]} : vector<16x90xbf16> to vector<16x30xbf16>
    %15 = vector.shape_cast %14 : vector<16x30xbf16> to vector<2x8x6x5xbf16>
    %16 = tpu.transpose %15, [0, 2, 1, 3] : vector<2x8x6x5xbf16> -> vector<2x6x8x5xbf16>
    %17 = vector.shape_cast %16 : vector<2x6x8x5xbf16> to vector<12x8x5xbf16>
    %18 = tpu.iota {dimensions = array<i32: 0>} : vector<8x8xi32>
    %19 = tpu.iota {dimensions = array<i32: 1>} : vector<8x8xi32>
    %20 = arith.cmpi sge, %18, %19 : vector<8x8xi32>
    %21 = vector.shape_cast %20 : vector<8x8xi1> to vector<1x8x8xi1>
    "tpu.trace_start"() <{level = 10 : i32, message = "gqd,gkd->gqk"}> : () -> ()
    %cst_4 = arith.constant dense<0.000000e+00> : vector<12x8x8xf32>
    %22 = tpu.matmul %9, %13, %cst_4 {dimension_numbers = #tpu.dot_dimension_numbers<[2], [2], [1], [1], [0, 0, 0, 1, 1, 1], [0], [0]>} : vector<12x8x5xbf16>, vector<12x8x5xbf16>, vector<12x8x8xf32> -> vector<12x8x8xf32>
    %cst_5 = arith.constant 0xFF800000 : f32
    "tpu.trace_stop"() : () -> ()
    %23 = vector.shape_cast %21 : vector<1x8x8xi1> to vector<1x8x8xi1>
    %24 = vector.broadcast %23 : vector<1x8x8xi1> to vector<12x8x8xi1>
    %25 = vector.broadcast %cst_5 : f32 to vector<12x8x8xf32>
    %26 = arith.select %24, %22, %25 : vector<12x8x8xi1>, vector<12x8x8xf32>
    %cst_6 = arith.constant dense<0xFF800000> : vector<12x8xf32>
    %27 = vector.multi_reduction <maximumf>, %26, %cst_6 [1] : vector<12x8x8xf32> to vector<12x8xf32>
    %28 = vector.shape_cast %27 : vector<12x8xf32> to vector<12x1x8xf32>
    %29 = vector.broadcast %28 : vector<12x1x8xf32> to vector<12x8x8xf32>
    %30 = arith.subf %26, %29 : vector<12x8x8xf32>
    %31 = math.exp %30 : vector<12x8x8xf32>
    %cst_7 = arith.constant dense<0.000000e+00> : vector<12x8xf32>
    %32 = vector.multi_reduction <add>, %31, %cst_7 [1] : vector<12x8x8xf32> to vector<12x8xf32>
    %33 = vector.shape_cast %32 : vector<12x8xf32> to vector<12x1x8xf32>
    %34 = tpu.reciprocal %33 {approx = true} : vector<12x1x8xf32> -> vector<12x1x8xf32>
    %35 = vector.broadcast %34 : vector<12x1x8xf32> to vector<12x8x8xf32>
    %36 = arith.mulf %31, %35 : vector<12x8x8xf32>
    %37 = arith.truncf %36 : vector<12x8x8xf32> to vector<12x8x8xbf16>
    "tpu.trace_start"() <{level = 10 : i32, message = "gqk,gkd->gqd"}> : () -> ()
    %cst_8 = arith.constant dense<0.000000e+00> : vector<12x8x5xf32>
    %38 = tpu.matmul %37, %17, %cst_8 {dimension_numbers = #tpu.dot_dimension_numbers<[2], [1], [1], [2], [0, 0, 0, 1, 1, 2], [0], [0]>} : vector<12x8x8xbf16>, vector<12x8x5xbf16>, vector<12x8x5xf32> -> vector<12x8x5xf32>
    "tpu.trace_stop"() : () -> ()
    %39 = arith.truncf %38 : vector<12x8x5xf32> to vector<12x8x5xbf16>
    %40 = vector.shape_cast %39 : vector<12x8x5xbf16> to vector<2x6x8x5xbf16>
    %41 = tpu.transpose %40, [0, 2, 1, 3] : vector<2x6x8x5xbf16> -> vector<2x8x6x5xbf16>
    %42 = vector.shape_cast %41 : vector<2x8x6x5xbf16> to vector<16x30xbf16>
    %c0_9 = arith.constant 0 : index
    %c0_10 = arith.constant 0 : index
    %43 = vector.load %arg3[%c0_9, %c0_10] : memref<30x30xbf16, #tpu.memory_space<vmem>>, vector<30x30xbf16>
    %cst_11 = arith.constant dense<0.000000e+00> : vector<16x30xf32>
    %44 = tpu.matmul %42, %43, %cst_11 {dimension_numbers = #tpu.dot_dimension_numbers<[1], [0], [0], [1], [0, 0, 1, 1], [], []>} : vector<16x30xbf16>, vector<30x30xbf16>, vector<16x30xf32> -> vector<16x30xf32>
    %c0_12 = arith.constant 0 : index
    %c0_13 = arith.constant 0 : index
    %45 = vector.load %arg4[%c0_12, %c0_13] : memref<1x30xf32, #tpu.memory_space<vmem>>, vector<1x30xf32>
    %46 = vector.broadcast %45 : vector<1x30xf32> to vector<16x30xf32>
    %47 = arith.addf %44, %46 : vector<16x30xf32>
    %48 = vector.shape_cast %47 : vector<16x30xf32> to vector<2x8x30xf32>
    %c0_14 = arith.constant 0 : index
    %c0_15 = arith.constant 0 : index
    %c0_16 = arith.constant 0 : index
    %49 = vector.load %arg5[%c0_14, %c0_15, %c0_16] : memref<2x8x30xf32, #tpu.memory_space<vmem>>, vector<2x8x30xf32>
    tpu.vector_store %arg5[%c0_14, %c0_15, %c0_16], %48 {strides = array<i32>} : memref<2x8x30xf32, #tpu.memory_space<vmem>>, vector<2x8x30xf32>,
    return
  }
  func.func @transform_0(%arg0: i32) -> (i32, i32, i32) {
    %c0_i32 = arith.constant 0 : i32
    %c0_i32_0 = arith.constant 0 : i32
    %c0_i32_1 = arith.constant 0 : i32
    %c0_i32_2 = arith.constant 0 : i32
    return %c0_i32, %c0_i32_0, %c0_i32_1 : i32, i32, i32
  }
  func.func @transform_1(%arg0: i32) -> (i32, i32) {
    %c0_i32 = arith.constant 0 : i32
    %c0_i32_0 = arith.constant 0 : i32
    %c0_i32_1 = arith.constant 0 : i32
    return %c0_i32, %c0_i32_0 : i32, i32
  }
  func.func @transform_2(%arg0: i32) -> (i32, i32) {
    %c0_i32 = arith.constant 0 : i32
    %c0_i32_0 = arith.constant 0 : i32
    %c0_i32_1 = arith.constant 0 : i32
    return %c0_i32, %c0_i32_0 : i32, i32
  }
  func.func @transform_3(%arg0: i32) -> (i32, i32) {
    %c0_i32 = arith.constant 0 : i32
    %c0_i32_0 = arith.constant 0 : i32
    %c0_i32_1 = arith.constant 0 : i32
    return %c0_i32, %c0_i32_0 : i32, i32
  }
  func.func @transform_4(%arg0: i32) -> (i32, i32, i32) {
    %c0_i32 = arith.constant 0 : i32
    %c0_i32_0 = arith.constant 0 : i32
    %c0_i32_1 = arith.constant 0 : i32
    %c0_i32_2 = arith.constant 0 : i32
    return %c0_i32, %c0_i32_0, %c0_i32_1 : i32, i32, i32
  }
}

</mosaic_0001>

<llo_original>
// kernel: tpu_custom_call.1
$region0: #{tpu_custom_call.1}
  #allocation0 [shape = 'u32[]', space=smem, size = 0x4, offset = 0x4, fixed_abs, tag = 'smem constant byte address 0x4 - core index']
  #allocation1 [shape = 'u32[144,128]{1,0:T(1,128)}', space=vmem, size = 0x12000, scoped, tag = 'internal scratch']
  %s0 = inlined_call_operand.hbm [shape: f32[2,8,30], index: 0, kind: input, shape index: {}]
  %s1 = inlined_call_operand.hbm [shape: bf16[30,90], index: 1, kind: input, shape index: {}]
  %s2 = inlined_call_operand.hbm [shape: bf16[30,30], index: 2, kind: input, shape index: {}]
  %s3 = inlined_call_operand.vmem [shape: f32[1,30], index: 3, kind: input, shape index: {}]
  %s4 = inlined_call_operand.hbm [shape: f32[2,8,30], index: 4, kind: output, shape index: {}]
  %s5 = sld [smem:[#allocation0]]
  $region38: #{tpu_custom_call.1} parent=0
    _
  %s7 = ssub.s32 1, %s5
  %s8 = scalar_select 0, %s7, %s5
  $region1: #{tpu_custom_call.1} parent=0
    #allocation2 [shape = 'u8[8192]{0}', space=vmem, size = 0x2000, scoped, tag = 'input window, operand 0, single buffered']
    #allocation3 [shape = 's32[1]{0}', space=sflag, size = 0x4, scoped, tag = 'scoped memory for tpu_custom_call.1']
    #allocation4 [shape = 's32[1]{0}', space=sflag, size = 0x4, scoped, tag = 'scoped memory for tpu_custom_call.1']
    #allocation5 [shape = 'u8[8192]{0}', space=vmem, size = 0x2000, scoped, tag = 'input window, operand 1, single buffered']
    #allocation6 [shape = 's32[1]{0}', space=sflag, size = 0x4, scoped, tag = 'scoped memory for tpu_custom_call.1']
    #allocation7 [shape = 'u8[8192]{0}', space=vmem, size = 0x2000, scoped, tag = 'input window, operand 2, single buffered']
    #allocation8 [shape = 'u8[8192]{0}', space=vmem, size = 0x2000, scoped, tag = 'output window, operand 0, single buffered']
    %9 = vsyncpa [#allocation3], 0
    %10 = vsyncpa [#allocation6], 0
    %11 = vsyncpa [#allocation4], 0
    // Predicated region
    $region2: #{tpu_custom_call.1} parent=1 // pred_check
      _
    $region3: #{tpu_custom_call.1} parent=1 // pred_check_branch
      %13 = sbr.rel (0) target = $region5
    $region4: #{tpu_custom_call.1} parent=1 // pred_region
      %s15 = ssub.s32 256, 256
      %16 = vsyncadd [#allocation3], %s15
      %s17 = sshll.u32 [#allocation2], 4
      %s18 = int_to_ptr.vmem [resolvable:$true] %s17
      %23 = dma.hbm_to_vmem [thread:$0]  %s0, 256, %s18, [#allocation3], 128, 128, 8
    $region5: #{tpu_custom_call.1} parent=1 // pred_fallthru
      _
    // Predicated region
    $region6: #{tpu_custom_call.1} parent=1 // pred_check
      _
    $region7: #{tpu_custom_call.1} parent=1 // pred_check_branch
      %25 = sbr.rel (0) target = $region9
    $region8: #{tpu_custom_call.1} parent=1 // pred_region
      %s27 = ssub.s32 256, 256
      %28 = vsyncadd [#allocation6], %s27
      %s29 = sshll.u32 [#allocation5], 4
      %s30 = int_to_ptr.vmem [resolvable:$true] %s29
      %35 = dma.hbm_to_vmem [thread:$0]  %s1, 256, %s30, [#allocation6], 64, 64, 4
    $region9: #{tpu_custom_call.1} parent=1 // pred_fallthru
      _
    // Predicated region
    $region10: #{tpu_custom_call.1} parent=1 // pred_check
      _
    $region11: #{tpu_custom_call.1} parent=1 // pred_check_branch
      %37 = sbr.rel (0) target = $region13
    $region12: #{tpu_custom_call.1} parent=1 // pred_region
      %s39 = ssub.s32 256, 256
      %40 = vsyncadd [#allocation6], %s39
      %s41 = sshll.u32 [#allocation7], 4
      %s42 = int_to_ptr.vmem [resolvable:$true] %s41
      %47 = dma.hbm_to_vmem [thread:$0]  %s2, 256, %s42, [#allocation6], 64, 64, 4
    $region13: #{tpu_custom_call.1} parent=1 // pred_fallthru
      _
    // Predicated region
    $region14: #{tpu_custom_call.1} parent=1 // pred_check
      _
    $region15: #{tpu_custom_call.1} parent=1 // pred_check_branch
      %49 = sbr.rel (0) target = $region17
    $region16: #{tpu_custom_call.1} parent=1 // pred_region
      _
    $region17: #{tpu_custom_call.1} parent=1 // pred_fallthru
      _
    // Predicated region
    $region18: #{tpu_custom_call.1} parent=1 // pred_check
      _
    $region19: #{tpu_custom_call.1} parent=1 // pred_check_branch
      %51 = sbr.rel (0) target = $region21
    $region20: #{tpu_custom_call.1} parent=1 // pred_region
      %52 = dma.done [#allocation3], 256
    $region21: #{tpu_custom_call.1} parent=1 // pred_fallthru
      _
    // Predicated region
    $region22: #{tpu_custom_call.1} parent=1 // pred_check
      _
    $region23: #{tpu_custom_call.1} parent=1 // pred_check_branch
      %54 = sbr.rel (0) target = $region25
    $region24: #{tpu_custom_call.1} parent=1 // pred_region
      %55 = dma.done [#allocation6], 256
    $region25: #{tpu_custom_call.1} parent=1 // pred_fallthru
      _
    // Predicated region
    $region26: #{tpu_custom_call.1} parent=1 // pred_check
      _
    $region27: #{tpu_custom_call.1} parent=1 // pred_check_branch
      %57 = sbr.rel (0) target = $region29
    $region28: #{tpu_custom_call.1} parent=1 // pred_region
      %58 = dma.done [#allocation6], 256
    $region29: #{tpu_custom_call.1} parent=1 // pred_fallthru
      _
    %v60 = vld [vmem:[#allocation2] sm:$0xff]
    %v61 = vld [vmem:[#allocation2 + $0x8] sm:$0xff]
    %v62 = vpack.c.bf16 %v61, %v60
    %v63 = vld [vmem:[#allocation5] sm:$0xf]
    %v64 = vld [vmem:[#allocation5 + $0x4] sm:$0xf]
    %v65 = vld [vmem:[#allocation5 + $0x8] sm:$0xf]
    %v66 = vld [vmem:[#allocation5 + $0xc] sm:$0x7]
    %v71 = vunpack.c.l.b16 %v63
    %v72 = vunpack.c.l.b16 %v64
    %v73 = vunpack.c.l.b16 %v65
    %v74 = vunpack.c.l.b16 %v66
    %v75 = vpack.c.b16 %v72, %v71
    %v76 = vpack.c.b16 %v74, %v73
    %vm78 = vcmask 244736
    %v80 = vsel %vm78, %v62, 0
    %vm82 = vcmask 1046528
    %v84 = vsel %vm82, %v76, 0
    %86 = vmatprep.subr.bf16.mxu0 0
    %87 = vmatpush1.bf16.msra.mxu0 %v75
    %88 = vmatprep.subr.bf16.mxu0 0
    %89 = vmatpush1.bf16.msra.mxu0 %v84
    %90 = vmatprep.subr.bf16.mxu0 0
    %91 = vmatpush1.bf16.msra.mxu0 0
    %92 = vmatprep.subr.bf16.mxu0 0
    %93 = vmatpush1.bf16.msra.mxu0 0
    %94 = vmatprep.subr.bf16.mxu0 0
    %95 = vmatpush1.bf16.msra.mxu0 0
    %96 = vmatprep.subr.bf16.mxu0 0
    %97 = vmatpush1.bf16.msra.mxu0 0
    %98 = vmatprep.subr.bf16.mxu0 0
    %99 = vmatpush1.bf16.msra.mxu0 0
    %100 = vmatprep.subr.bf16.mxu0 0
    %101 = vmatpush1.bf16.msra.mxu0 0
    %102 = vmatprep.subr.bf16.mxu0 0
    %103 = vmatpush1.bf16.msra.mxu0 0
    %104 = vmatprep.subr.bf16.mxu0 0
    %105 = vmatpush1.bf16.msra.mxu0 0
    %106 = vmatprep.subr.bf16.mxu0 0
    %107 = vmatpush1.bf16.msra.mxu0 0
    %108 = vmatprep.subr.bf16.mxu0 0
    %109 = vmatpush1.bf16.msra.mxu0 0
    %110 = vmatprep.subr.bf16.mxu0 0
    %111 = vmatpush1.bf16.msra.mxu0 0
    %112 = vmatprep.subr.bf16.mxu0 0
    %113 = vmatpush1.bf16.msra.mxu0 0
    %114 = vmatprep.subr.bf16.mxu0 0
    %115 = vmatpush1.bf16.msra.mxu0 0
    %116 = vmatprep.subr.bf16.mxu0 0
    %117 = vmatpush1.bf16.msra.mxu0 0
    %118 = vmatprep.mubr.bf16.mxu0 0
    %119 = vmatmul.mubr.bf16.gmra.mrb[0].mxu0 %v80
    %v120 = vpop.f32.mrb[0].mxu0
    %v121 = vadd.f32 0.0, %v120
    %v122 = vpop.f32.mrb[0].mxu0
    %v123 = vpop.f32.mrb[0].mxu0
    %v124 = vadd.f32 0.0, %v123
    %v125 = vpop.f32.mrb[0].mxu0
    %126 = vdwg.mxu0
    %v127 = vpack.c.bf16 %v124, %v121
    %129 = vrot.lane.b32.xlu0 %v127, 123
    %v130 = vpop.permute.xlu0 %129
    %131 = vrot.lane.b32.xlu0 %v127, 118
    %v132 = vpop.permute.xlu0 %131
    %133 = vrot.lane.b32.xlu0 %v127, 113
    %v134 = vpop.permute.xlu0 %133
    %135 = vrot.lane.b32.xlu0 %v127, 108
    %v136 = vpop.permute.xlu0 %135
    %137 = vrot.lane.b32.xlu0 %v127, 103
    %v138 = vpop.permute.xlu0 %137
    %v141 = vpack.i.b16 %v130, %v127
    %v143 = vshrl.u32 %v127, 16
    %v144 = vshrl.u32 %v130, 16
    %v145 = vpack.i.b16 %v144, %v143
    %v149 = vpack.i.b16 %v134, %v132
    %v151 = vshrl.u32 %v132, 16
    %v152 = vshrl.u32 %v134, 16
    %v153 = vpack.i.b16 %v152, %v151
    %v157 = vpack.i.b16 %v138, %v136
    %v159 = vshrl.u32 %v136, 16
    %v160 = vshrl.u32 %v138, 16
    %v161 = vpack.i.b16 %v160, %v159
    %v164 = vpack.i.b16 0, 0
    %v166 = vshrl.u32 0, 16
    %v167 = vpack.i.b16 %v166, %v166
    %v169 = vcombine.low %v141, %v157
    %v170 = vcombine.high %v141, %v157
    %v172 = vunpack.c.l.s4 1983009808
    %v173 = vunpack.c.0.s8 %v172
    %v174 = vlaneseq
    %v175 = vshrl.u32 %v174, 7
    %v176 = vsub.s32 %v173, %v175
    %v177 = vrot.slane %v169, %v176
    %v179 = vunpack.c.l.s4 1983009808
    %v180 = vunpack.c.0.s8 %v179
    %v181 = vlaneseq
    %v182 = vshrl.u32 %v181, 7
    %v183 = vsub.s32 %v180, %v182
    %v184 = vrot.slane %v170, %v183
    %v185 = vcombine.high %v149, %v164
    %v187 = vunpack.c.l.s4 1983009808
    %v188 = vunpack.c.0.s8 %v187
    %v189 = vlaneseq
    %v190 = vshrl.u32 %v189, 7
    %v191 = vsub.s32 %v188, %v190
    %v192 = vrot.slane %v149, %v191
    %v194 = vunpack.c.l.s4 1983009808
    %v195 = vunpack.c.0.s8 %v194
    %v196 = vlaneseq
    %v197 = vshrl.u32 %v196, 7
    %v198 = vsub.s32 %v195, %v197
    %v199 = vrot.slane %v185, %v198
    %v200 = vcombine.low %v177, %v192
    %v201 = vcombine.high %v177, %v192
    %v203 = vunpack.c.l.s4 1934713408
    %v204 = vunpack.c.0.s8 %v203
    %v205 = vlaneseq
    %v206 = vshrl.u32 %v205, 7
    %v207 = vsub.s32 %v204, %v206
    %v208 = vrot.slane %v200, %v207
    %v210 = vunpack.c.l.s4 1934713408
    %v211 = vunpack.c.0.s8 %v210
    %v212 = vlaneseq
    %v213 = vshrl.u32 %v212, 7
    %v214 = vsub.s32 %v211, %v213
    %v215 = vrot.slane %v201, %v214
    %v216 = vcombine.low %v184, %v199
    %v217 = vcombine.high %v184, %v199
    %v219 = vunpack.c.l.s4 1934713408
    %v220 = vunpack.c.0.s8 %v219
    %v221 = vlaneseq
    %v222 = vshrl.u32 %v221, 7
    %v223 = vsub.s32 %v220, %v222
    %v224 = vrot.slane %v216, %v223
    %v226 = vunpack.c.l.s4 1934713408
    %v227 = vunpack.c.0.s8 %v226
    %v228 = vlaneseq
    %v229 = vshrl.u32 %v228, 7
    %v230 = vsub.s32 %v227, %v229
    %v231 = vrot.slane %v217, %v230
    %v232 = vcombine.high %v208, 0
    %v233 = vcombine.high %v215, 0
    %v234 = vcombine.high %v224, 0
    %v235 = vcombine.high %v231, 0
    %v236 = vcombine.low %v145, %v161
    %v237 = vcombine.high %v145, %v161
    %v239 = vunpack.c.l.s4 1983009808
    %v240 = vunpack.c.0.s8 %v239
    %v241 = vlaneseq
    %v242 = vshrl.u32 %v241, 7
    %v243 = vsub.s32 %v240, %v242
    %v244 = vrot.slane %v236, %v243
    %v246 = vunpack.c.l.s4 1983009808
    %v247 = vunpack.c.0.s8 %v246
    %v248 = vlaneseq
    %v249 = vshrl.u32 %v248, 7
    %v250 = vsub.s32 %v247, %v249
    %v251 = vrot.slane %v237, %v250
    %v252 = vcombine.high %v153, %v167
    %v254 = vunpack.c.l.s4 1983009808
    %v255 = vunpack.c.0.s8 %v254
    %v256 = vlaneseq
    %v257 = vshrl.u32 %v256, 7
    %v258 = vsub.s32 %v255, %v257
    %v259 = vrot.slane %v153, %v258
    %v261 = vunpack.c.l.s4 1983009808
    %v262 = vunpack.c.0.s8 %v261
    %v263 = vlaneseq
    %v264 = vshrl.u32 %v263, 7
    %v265 = vsub.s32 %v262, %v264
    %v266 = vrot.slane %v252, %v265
    %v267 = vcombine.low %v244, %v259
    %v268 = vcombine.high %v244, %v259
    %v270 = vunpack.c.l.s4 1934713408
    %v271 = vunpack.c.0.s8 %v270
    %v272 = vlaneseq
    %v273 = vshrl.u32 %v272, 7
    %v274 = vsub.s32 %v271, %v273
    %v275 = vrot.slane %v267, %v274
    %v277 = vunpack.c.l.s4 1934713408
    %v278 = vunpack.c.0.s8 %v277
    %v279 = vlaneseq
    %v280 = vshrl.u32 %v279, 7
    %v281 = vsub.s32 %v278, %v280
    %v282 = vrot.slane %v268, %v281
    %v283 = vcombine.low %v251, %v266
    %v284 = vcombine.high %v251, %v266
    %v286 = vunpack.c.l.s4 1934713408
    %v287 = vunpack.c.0.s8 %v286
    %v288 = vlaneseq
    %v289 = vshrl.u32 %v288, 7
    %v290 = vsub.s32 %v287, %v289
    %v291 = vrot.slane %v283, %v290
    %v293 = vunpack.c.l.s4 1934713408
    %v294 = vunpack.c.0.s8 %v293
    %v295 = vlaneseq
    %v296 = vshrl.u32 %v295, 7
    %v297 = vsub.s32 %v294, %v296
    %v298 = vrot.slane %v284, %v297
    %v299 = vcombine.high %v275, 0
    %v300 = vcombine.high %v282, 0
    %v301 = vcombine.high %v291, 0
    %v302 = vcombine.high %v298, 0
    %v303 = vcombine.low %v208, %v215
    %v305 = vunpack.c.l.s4 1983009808
    %v306 = vunpack.c.0.s8 %v305
    %v307 = vlaneseq
    %v308 = vshrl.u32 %v307, 7
    %v309 = vsub.s32 %v306, %v308
    %v310 = vrot.slane %v303, %v309
    %v311 = vcombine.low %v232, %v233
    %v313 = vunpack.c.l.s4 1983009808
    %v314 = vunpack.c.0.s8 %v313
    %v315 = vlaneseq
    %v316 = vshrl.u32 %v315, 7
    %v317 = vsub.s32 %v314, %v316
    %v318 = vrot.slane %v311, %v317
    %v319 = vcombine.low %v310, %v318
    %v320 = vcombine.high %v310, %v318
    %v322 = vunpack.c.l.s4 1934713408
    %v323 = vunpack.c.0.s8 %v322
    %v324 = vlaneseq
    %v325 = vshrl.u32 %v324, 7
    %v326 = vsub.s32 %v323, %v325
    %v327 = vrot.slane %v319, %v326
    %v328 = vcombine.high %v327, 0
    %v330 = vunpack.c.l.s4 1934713408
    %v331 = vunpack.c.0.s8 %v330
    %v332 = vlaneseq
    %v333 = vshrl.u32 %v332, 7
    %v334 = vsub.s32 %v331, %v333
    %v335 = vrot.slane %v320, %v334
    %v336 = vcombine.low %v275, %v282
    %v338 = vunpack.c.l.s4 1983009808
    %v339 = vunpack.c.0.s8 %v338
    %v340 = vlaneseq
    %v341 = vshrl.u32 %v340, 7
    %v342 = vsub.s32 %v339, %v341
    %v343 = vrot.slane %v336, %v342
    %v344 = vcombine.low %v299, %v300
    %v346 = vunpack.c.l.s4 1983009808
    %v347 = vunpack.c.0.s8 %v346
    %v348 = vlaneseq
    %v349 = vshrl.u32 %v348, 7
    %v350 = vsub.s32 %v347, %v349
    %v351 = vrot.slane %v344, %v350
    %v352 = vcombine.low %v343, %v351
    %v353 = vcombine.high %v343, %v351
    %v355 = vunpack.c.l.s4 1934713408
    %v356 = vunpack.c.0.s8 %v355
    %v357 = vlaneseq
    %v358 = vshrl.u32 %v357, 7
    %v359 = vsub.s32 %v356, %v358
    %v360 = vrot.slane %v352, %v359
    %v361 = vcombine.high %v360, 0
    %v363 = vunpack.c.l.s4 1934713408
    %v364 = vunpack.c.0.s8 %v363
    %v365 = vlaneseq
    %v366 = vshrl.u32 %v365, 7
    %v367 = vsub.s32 %v364, %v366
    %v368 = vrot.slane %v353, %v367
    %v369 = vcombine.low %v224, %v231
    %v371 = vunpack.c.l.s4 1983009808
    %v372 = vunpack.c.0.s8 %v371
    %v373 = vlaneseq
    %v374 = vshrl.u32 %v373, 7
    %v375 = vsub.s32 %v372, %v374
    %v376 = vrot.slane %v369, %v375
    %v377 = vcombine.low %v234, %v235
    %v379 = vunpack.c.l.s4 1983009808
    %v380 = vunpack.c.0.s8 %v379
    %v381 = vlaneseq
    %v382 = vshrl.u32 %v381, 7
    %v383 = vsub.s32 %v380, %v382
    %v384 = vrot.slane %v377, %v383
    %v385 = vcombine.low %v376, %v384
    %v386 = vcombine.high %v376, %v384
    %v388 = vunpack.c.l.s4 1934713408
    %v389 = vunpack.c.0.s8 %v388
    %v390 = vlaneseq
    %v391 = vshrl.u32 %v390, 7
    %v392 = vsub.s32 %v389, %v391
    %v393 = vrot.slane %v385, %v392
    %v394 = vcombine.high %v393, 0
    %v396 = vunpack.c.l.s4 1934713408
    %v397 = vunpack.c.0.s8 %v396
    %v398 = vlaneseq
    %v399 = vshrl.u32 %v398, 7
    %v400 = vsub.s32 %v397, %v399
    %v401 = vrot.slane %v386, %v400
    %v402 = vcombine.low %v291, %v298
    %v404 = vunpack.c.l.s4 1983009808
    %v405 = vunpack.c.0.s8 %v404
    %v406 = vlaneseq
    %v407 = vshrl.u32 %v406, 7
    %v408 = vsub.s32 %v405, %v407
    %v409 = vrot.slane %v402, %v408
    %v410 = vcombine.low %v301, %v302
    %v412 = vunpack.c.l.s4 1983009808
    %v413 = vunpack.c.0.s8 %v412
    %v414 = vlaneseq
    %v415 = vshrl.u32 %v414, 7
    %v416 = vsub.s32 %v413, %v415
    %v417 = vrot.slane %v410, %v416
    %v418 = vcombine.low %v409, %v417
    %v419 = vcombine.high %v409, %v417
    %v421 = vunpack.c.l.s4 1934713408
    %v422 = vunpack.c.0.s8 %v421
    %v423 = vlaneseq
    %v424 = vshrl.u32 %v423, 7
    %v425 = vsub.s32 %v422, %v424
    %v426 = vrot.slane %v418, %v425
    %v427 = vcombine.high %v426, 0
    %v429 = vunpack.c.l.s4 1934713408
    %v430 = vunpack.c.0.s8 %v429
    %v431 = vlaneseq
    %v432 = vshrl.u32 %v431, 7
    %v433 = vsub.s32 %v430, %v432
    %v434 = vrot.slane %v419, %v433
    %v437 = vpack.i.b16 %v360, %v327
    %v438 = vshrl.u32 %v327, 16
    %v439 = vshrl.u32 %v360, 16
    %v440 = vpack.i.b16 %v439, %v438
    %v443 = vpack.i.b16 %v361, %v328
    %v444 = vshrl.u32 %v328, 16
    %v445 = vshrl.u32 %v361, 16
    %v446 = vpack.i.b16 %v445, %v444
    %v449 = vpack.i.b16 %v368, %v335
    %v450 = vshrl.u32 %v335, 16
    %v451 = vshrl.u32 %v368, 16
    %v452 = vpack.i.b16 %v451, %v450
    %v455 = vpack.i.b16 %v426, %v393
    %v456 = vshrl.u32 %v393, 16
    %v457 = vshrl.u32 %v426, 16
    %v458 = vpack.i.b16 %v457, %v456
    %v461 = vpack.i.b16 %v427, %v394
    %v462 = vshrl.u32 %v394, 16
    %v463 = vshrl.u32 %v427, 16
    %v464 = vpack.i.b16 %v463, %v462
    %v467 = vpack.i.b16 %v434, %v401
    %v468 = vshrl.u32 %v401, 16
    %v469 = vshrl.u32 %v434, 16
    %v470 = vpack.i.b16 %v469, %v468
    %471 = vrot.lane.b32.xlu0 %v127, 98
    %v472 = vpop.permute.xlu0 %471
    %473 = vrot.lane.b32.xlu0 %v130, 98
    %v474 = vpop.permute.xlu0 %473
    %475 = vrot.lane.b32.xlu0 %v132, 98
    %v476 = vpop.permute.xlu0 %475
    %477 = vrot.lane.b32.xlu0 %v134, 98
    %v478 = vpop.permute.xlu0 %477
    %479 = vrot.lane.b32.xlu0 %v136, 98
    %v480 = vpop.permute.xlu0 %479
    %481 = vrot.lane.b32.xlu0 %v138, 98
    %v482 = vpop.permute.xlu0 %481
    %v485 = vpack.i.b16 %v474, %v472
    %v487 = vshrl.u32 %v472, 16
    %v488 = vshrl.u32 %v474, 16
    %v489 = vpack.i.b16 %v488, %v487
    %v493 = vpack.i.b16 %v478, %v476
    %v495 = vshrl.u32 %v476, 16
    %v496 = vshrl.u32 %v478, 16
    %v497 = vpack.i.b16 %v496, %v495
    %v501 = vpack.i.b16 %v482, %v480
    %v503 = vshrl.u32 %v480, 16
    %v504 = vshrl.u32 %v482, 16
    %v505 = vpack.i.b16 %v504, %v503
    %v507 = vcombine.low %v485, %v501
    %v508 = vcombine.high %v485, %v501
    %v510 = vunpack.c.l.s4 1983009808
    %v511 = vunpack.c.0.s8 %v510
    %v512 = vlaneseq
    %v513 = vshrl.u32 %v512, 7
    %v514 = vsub.s32 %v511, %v513
    %v515 = vrot.slane %v507, %v514
    %v517 = vunpack.c.l.s4 1983009808
    %v518 = vunpack.c.0.s8 %v517
    %v519 = vlaneseq
    %v520 = vshrl.u32 %v519, 7
    %v521 = vsub.s32 %v518, %v520
    %v522 = vrot.slane %v508, %v521
    %v523 = vcombine.high %v493, %v164
    %v525 = vunpack.c.l.s4 1983009808
    %v526 = vunpack.c.0.s8 %v525
    %v527 = vlaneseq
    %v528 = vshrl.u32 %v527, 7
    %v529 = vsub.s32 %v526, %v528
    %v530 = vrot.slane %v493, %v529
    %v532 = vunpack.c.l.s4 1983009808
    %v533 = vunpack.c.0.s8 %v532
    %v534 = vlaneseq
    %v535 = vshrl.u32 %v534, 7
    %v536 = vsub.s32 %v533, %v535
    %v537 = vrot.slane %v523, %v536
    %v538 = vcombine.low %v515, %v530
    %v539 = vcombine.high %v515, %v530
    %v541 = vunpack.c.l.s4 1934713408
    %v542 = vunpack.c.0.s8 %v541
    %v543 = vlaneseq
    %v544 = vshrl.u32 %v543, 7
    %v545 = vsub.s32 %v542, %v544
    %v546 = vrot.slane %v538, %v545
    %v548 = vunpack.c.l.s4 1934713408
    %v549 = vunpack.c.0.s8 %v548
    %v550 = vlaneseq
    %v551 = vshrl.u32 %v550, 7
    %v552 = vsub.s32 %v549, %v551
    %v553 = vrot.slane %v539, %v552
    %v554 = vcombine.low %v522, %v537
    %v555 = vcombine.high %v522, %v537
    %v557 = vunpack.c.l.s4 1934713408
    %v558 = vunpack.c.0.s8 %v557
    %v559 = vlaneseq
    %v560 = vshrl.u32 %v559, 7
    %v561 = vsub.s32 %v558, %v560
    %v562 = vrot.slane %v554, %v561
    %v564 = vunpack.c.l.s4 1934713408
    %v565 = vunpack.c.0.s8 %v564
    %v566 = vlaneseq
    %v567 = vshrl.u32 %v566, 7
    %v568 = vsub.s32 %v565, %v567
    %v569 = vrot.slane %v555, %v568
    %v570 = vcombine.high %v546, 0
    %v571 = vcombine.high %v553, 0
    %v572 = vcombine.high %v562, 0
    %v573 = vcombine.high %v569, 0
    %v574 = vcombine.low %v489, %v505
    %v575 = vcombine.high %v489, %v505
    %v577 = vunpack.c.l.s4 1983009808
    %v578 = vunpack.c.0.s8 %v577
    %v579 = vlaneseq
    %v580 = vshrl.u32 %v579, 7
    %v581 = vsub.s32 %v578, %v580
    %v582 = vrot.slane %v574, %v581
    %v584 = vunpack.c.l.s4 1983009808
    %v585 = vunpack.c.0.s8 %v584
    %v586 = vlaneseq
    %v587 = vshrl.u32 %v586, 7
    %v588 = vsub.s32 %v585, %v587
    %v589 = vrot.slane %v575, %v588
    %v590 = vcombine.high %v497, %v167
    %v592 = vunpack.c.l.s4 1983009808
    %v593 = vunpack.c.0.s8 %v592
    %v594 = vlaneseq
    %v595 = vshrl.u32 %v594, 7
    %v596 = vsub.s32 %v593, %v595
    %v597 = vrot.slane %v497, %v596
    %v599 = vunpack.c.l.s4 1983009808
    %v600 = vunpack.c.0.s8 %v599
    %v601 = vlaneseq
    %v602 = vshrl.u32 %v601, 7
    %v603 = vsub.s32 %v600, %v602
    %v604 = vrot.slane %v590, %v603
    %v605 = vcombine.low %v582, %v597
    %v606 = vcombine.high %v582, %v597
    %v608 = vunpack.c.l.s4 1934713408
    %v609 = vunpack.c.0.s8 %v608
    %v610 = vlaneseq
    %v611 = vshrl.u32 %v610, 7
    %v612 = vsub.s32 %v609, %v611
    %v613 = vrot.slane %v605, %v612
    %v615 = vunpack.c.l.s4 1934713408
    %v616 = vunpack.c.0.s8 %v615
    %v617 = vlaneseq
    %v618 = vshrl.u32 %v617, 7
    %v619 = vsub.s32 %v616, %v618
    %v620 = vrot.slane %v606, %v619
    %v621 = vcombine.low %v589, %v604
    %v622 = vcombine.high %v589, %v604
    %v624 = vunpack.c.l.s4 1934713408
    %v625 = vunpack.c.0.s8 %v624
    %v626 = vlaneseq
    %v627 = vshrl.u32 %v626, 7
    %v628 = vsub.s32 %v625, %v627
    %v629 = vrot.slane %v621, %v628
    %v631 = vunpack.c.l.s4 1934713408
    %v632 = vunpack.c.0.s8 %v631
    %v633 = vlaneseq
    %v634 = vshrl.u32 %v633, 7
    %v635 = vsub.s32 %v632, %v634
    %v636 = vrot.slane %v622, %v635
    %v637 = vcombine.high %v613, 0
    %v638 = vcombine.high %v620, 0
    %v639 = vcombine.high %v629, 0
    %v640 = vcombine.high %v636, 0
    %v641 = vcombine.low %v546, %v553
    %v643 = vunpack.c.l.s4 1983009808
    %v644 = vunpack.c.0.s8 %v643
    %v645 = vlaneseq
    %v646 = vshrl.u32 %v645, 7
    %v647 = vsub.s32 %v644, %v646
    %v648 = vrot.slane %v641, %v647
    %v649 = vcombine.low %v570, %v571
    %v651 = vunpack.c.l.s4 1983009808
    %v652 = vunpack.c.0.s8 %v651
    %v653 = vlaneseq
    %v654 = vshrl.u32 %v653, 7
    %v655 = vsub.s32 %v652, %v654
    %v656 = vrot.slane %v649, %v655
    %v657 = vcombine.low %v648, %v656
    %v658 = vcombine.high %v648, %v656
    %v660 = vunpack.c.l.s4 1934713408
    %v661 = vunpack.c.0.s8 %v660
    %v662 = vlaneseq
    %v663 = vshrl.u32 %v662, 7
    %v664 = vsub.s32 %v661, %v663
    %v665 = vrot.slane %v657, %v664
    %v666 = vcombine.high %v665, 0
    %v668 = vunpack.c.l.s4 1934713408
    %v669 = vunpack.c.0.s8 %v668
    %v670 = vlaneseq
    %v671 = vshrl.u32 %v670, 7
    %v672 = vsub.s32 %v669, %v671
    %v673 = vrot.slane %v658, %v672
    %v674 = vcombine.low %v613, %v620
    %v676 = vunpack.c.l.s4 1983009808
    %v677 = vunpack.c.0.s8 %v676
    %v678 = vlaneseq
    %v679 = vshrl.u32 %v678, 7
    %v680 = vsub.s32 %v677, %v679
    %v681 = vrot.slane %v674, %v680
    %v682 = vcombine.low %v637, %v638
    %v684 = vunpack.c.l.s4 1983009808
    %v685 = vunpack.c.0.s8 %v684
    %v686 = vlaneseq
    %v687 = vshrl.u32 %v686, 7
    %v688 = vsub.s32 %v685, %v687
    %v689 = vrot.slane %v682, %v688
    %v690 = vcombine.low %v681, %v689
    %v691 = vcombine.high %v681, %v689
    %v693 = vunpack.c.l.s4 1934713408
    %v694 = vunpack.c.0.s8 %v693
    %v695 = vlaneseq
    %v696 = vshrl.u32 %v695, 7
    %v697 = vsub.s32 %v694, %v696
    %v698 = vrot.slane %v690, %v697
    %v699 = vcombine.high %v698, 0
    %v701 = vunpack.c.l.s4 1934713408
    %v702 = vunpack.c.0.s8 %v701
    %v703 = vlaneseq
    %v704 = vshrl.u32 %v703, 7
    %v705 = vsub.s32 %v702, %v704
    %v706 = vrot.slane %v691, %v705
    %v707 = vcombine.low %v562, %v569
    %v709 = vunpack.c.l.s4 1983009808
    %v710 = vunpack.c.0.s8 %v709
    %v711 = vlaneseq
    %v712 = vshrl.u32 %v711, 7
    %v713 = vsub.s32 %v710, %v712
    %v714 = vrot.slane %v707, %v713
    %v715 = vcombine.low %v572, %v573
    %v717 = vunpack.c.l.s4 1983009808
    %v718 = vunpack.c.0.s8 %v717
    %v719 = vlaneseq
    %v720 = vshrl.u32 %v719, 7
    %v721 = vsub.s32 %v718, %v720
    %v722 = vrot.slane %v715, %v721
    %v723 = vcombine.low %v714, %v722
    %v724 = vcombine.high %v714, %v722
    %v726 = vunpack.c.l.s4 1934713408
    %v727 = vunpack.c.0.s8 %v726
    %v728 = vlaneseq
    %v729 = vshrl.u32 %v728, 7
    %v730 = vsub.s32 %v727, %v729
    %v731 = vrot.slane %v723, %v730
    %v732 = vcombine.high %v731, 0
    %v734 = vunpack.c.l.s4 1934713408
    %v735 = vunpack.c.0.s8 %v734
    %v736 = vlaneseq
    %v737 = vshrl.u32 %v736, 7
    %v738 = vsub.s32 %v735, %v737
    %v739 = vrot.slane %v724, %v738
    %v740 = vcombine.low %v629, %v636
    %v742 = vunpack.c.l.s4 1983009808
    %v743 = vunpack.c.0.s8 %v742
    %v744 = vlaneseq
    %v745 = vshrl.u32 %v744, 7
    %v746 = vsub.s32 %v743, %v745
    %v747 = vrot.slane %v740, %v746
    %v748 = vcombine.low %v639, %v640
    %v750 = vunpack.c.l.s4 1983009808
    %v751 = vunpack.c.0.s8 %v750
    %v752 = vlaneseq
    %v753 = vshrl.u32 %v752, 7
    %v754 = vsub.s32 %v751, %v753
    %v755 = vrot.slane %v748, %v754
    %v756 = vcombine.low %v747, %v755
    %v757 = vcombine.high %v747, %v755
    %v759 = vunpack.c.l.s4 1934713408
    %v760 = vunpack.c.0.s8 %v759
    %v761 = vlaneseq
    %v762 = vshrl.u32 %v761, 7
    %v763 = vsub.s32 %v760, %v762
    %v764 = vrot.slane %v756, %v763
    %v765 = vcombine.high %v764, 0
    %v767 = vunpack.c.l.s4 1934713408
    %v768 = vunpack.c.0.s8 %v767
    %v769 = vlaneseq
    %v770 = vshrl.u32 %v769, 7
    %v771 = vsub.s32 %v768, %v770
    %v772 = vrot.slane %v757, %v771
    %v775 = vpack.i.b16 %v698, %v665
    %v776 = vshrl.u32 %v665, 16
    %v777 = vshrl.u32 %v698, 16
    %v778 = vpack.i.b16 %v777, %v776
    %v781 = vpack.i.b16 %v699, %v666
    %v782 = vshrl.u32 %v666, 16
    %v783 = vshrl.u32 %v699, 16
    %v784 = vpack.i.b16 %v783, %v782
    %v787 = vpack.i.b16 %v706, %v673
    %v788 = vshrl.u32 %v673, 16
    %v789 = vshrl.u32 %v706, 16
    %v790 = vpack.i.b16 %v789, %v788
    %v793 = vpack.i.b16 %v764, %v731
    %v794 = vshrl.u32 %v731, 16
    %v795 = vshrl.u32 %v764, 16
    %v796 = vpack.i.b16 %v795, %v794
    %v799 = vpack.i.b16 %v765, %v732
    %v800 = vshrl.u32 %v732, 16
    %v801 = vshrl.u32 %v765, 16
    %v802 = vpack.i.b16 %v801, %v800
    %v805 = vpack.i.b16 %v772, %v739
    %v806 = vshrl.u32 %v739, 16
    %v807 = vshrl.u32 %v772, 16
    %v808 = vpack.i.b16 %v807, %v806
    %809 = vrot.lane.b32.xlu0 %v127, 68
    %v810 = vpop.permute.xlu0 %809
    %811 = vrot.lane.b32.xlu0 %v130, 68
    %v812 = vpop.permute.xlu0 %811
    %813 = vrot.lane.b32.xlu0 %v132, 68
    %v814 = vpop.permute.xlu0 %813
    %815 = vrot.lane.b32.xlu0 %v134, 68
    %v816 = vpop.permute.xlu0 %815
    %817 = vrot.lane.b32.xlu0 %v136, 68
    %v818 = vpop.permute.xlu0 %817
    %819 = vrot.lane.b32.xlu0 %v138, 68
    %v820 = vpop.permute.xlu0 %819
    %v823 = vpack.i.b16 %v812, %v810
    %v825 = vshrl.u32 %v810, 16
    %v826 = vshrl.u32 %v812, 16
    %v827 = vpack.i.b16 %v826, %v825
    %v831 = vpack.i.b16 %v816, %v814
    %v833 = vshrl.u32 %v814, 16
    %v834 = vshrl.u32 %v816, 16
    %v835 = vpack.i.b16 %v834, %v833
    %v839 = vpack.i.b16 %v820, %v818
    %v841 = vshrl.u32 %v818, 16
    %v842 = vshrl.u32 %v820, 16
    %v843 = vpack.i.b16 %v842, %v841
    %v845 = vcombine.low %v823, %v839
    %v846 = vcombine.high %v823, %v839
    %v848 = vunpack.c.l.s4 1983009808
    %v849 = vunpack.c.0.s8 %v848
    %v850 = vlaneseq
    %v851 = vshrl.u32 %v850, 7
    %v852 = vsub.s32 %v849, %v851
    %v853 = vrot.slane %v845, %v852
    %v855 = vunpack.c.l.s4 1983009808
    %v856 = vunpack.c.0.s8 %v855
    %v857 = vlaneseq
    %v858 = vshrl.u32 %v857, 7
    %v859 = vsub.s32 %v856, %v858
    %v860 = vrot.slane %v846, %v859
    %v861 = vcombine.high %v831, %v164
    %v863 = vunpack.c.l.s4 1983009808
    %v864 = vunpack.c.0.s8 %v863
    %v865 = vlaneseq
    %v866 = vshrl.u32 %v865, 7
    %v867 = vsub.s32 %v864, %v866
    %v868 = vrot.slane %v831, %v867
    %v870 = vunpack.c.l.s4 1983009808
    %v871 = vunpack.c.0.s8 %v870
    %v872 = vlaneseq
    %v873 = vshrl.u32 %v872, 7
    %v874 = vsub.s32 %v871, %v873
    %v875 = vrot.slane %v861, %v874
    %v876 = vcombine.low %v853, %v868
    %v877 = vcombine.high %v853, %v868
    %v879 = vunpack.c.l.s4 1934713408
    %v880 = vunpack.c.0.s8 %v879
    %v881 = vlaneseq
    %v882 = vshrl.u32 %v881, 7
    %v883 = vsub.s32 %v880, %v882
    %v884 = vrot.slane %v876, %v883
    %v886 = vunpack.c.l.s4 1934713408
    %v887 = vunpack.c.0.s8 %v886
    %v888 = vlaneseq
    %v889 = vshrl.u32 %v888, 7
    %v890 = vsub.s32 %v887, %v889
    %v891 = vrot.slane %v877, %v890
    %v892 = vcombine.low %v860, %v875
    %v893 = vcombine.high %v860, %v875
    %v895 = vunpack.c.l.s4 1934713408
    %v896 = vunpack.c.0.s8 %v895
    %v897 = vlaneseq
    %v898 = vshrl.u32 %v897, 7
    %v899 = vsub.s32 %v896, %v898
    %v900 = vrot.slane %v892, %v899
    %v902 = vunpack.c.l.s4 1934713408
    %v903 = vunpack.c.0.s8 %v902
    %v904 = vlaneseq
    %v905 = vshrl.u32 %v904, 7
    %v906 = vsub.s32 %v903, %v905
    %v907 = vrot.slane %v893, %v906
    %v908 = vcombine.high %v884, 0
    %v909 = vcombine.high %v891, 0
    %v910 = vcombine.high %v900, 0
    %v911 = vcombine.high %v907, 0
    %v912 = vcombine.low %v827, %v843
    %v913 = vcombine.high %v827, %v843
    %v915 = vunpack.c.l.s4 1983009808
    %v916 = vunpack.c.0.s8 %v915
    %v917 = vlaneseq
    %v918 = vshrl.u32 %v917, 7
    %v919 = vsub.s32 %v916, %v918
    %v920 = vrot.slane %v912, %v919
    %v922 = vunpack.c.l.s4 1983009808
    %v923 = vunpack.c.0.s8 %v922
    %v924 = vlaneseq
    %v925 = vshrl.u32 %v924, 7
    %v926 = vsub.s32 %v923, %v925
    %v927 = vrot.slane %v913, %v926
    %v928 = vcombine.high %v835, %v167
    %v930 = vunpack.c.l.s4 1983009808
    %v931 = vunpack.c.0.s8 %v930
    %v932 = vlaneseq
    %v933 = vshrl.u32 %v932, 7
    %v934 = vsub.s32 %v931, %v933
    %v935 = vrot.slane %v835, %v934
    %v937 = vunpack.c.l.s4 1983009808
    %v938 = vunpack.c.0.s8 %v937
    %v939 = vlaneseq
    %v940 = vshrl.u32 %v939, 7
    %v941 = vsub.s32 %v938, %v940
    %v942 = vrot.slane %v928, %v941
    %v943 = vcombine.low %v920, %v935
    %v944 = vcombine.high %v920, %v935
    %v946 = vunpack.c.l.s4 1934713408
    %v947 = vunpack.c.0.s8 %v946
    %v948 = vlaneseq
    %v949 = vshrl.u32 %v948, 7
    %v950 = vsub.s32 %v947, %v949
    %v951 = vrot.slane %v943, %v950
    %v953 = vunpack.c.l.s4 1934713408
    %v954 = vunpack.c.0.s8 %v953
    %v955 = vlaneseq
    %v956 = vshrl.u32 %v955, 7
    %v957 = vsub.s32 %v954, %v956
    %v958 = vrot.slane %v944, %v957
    %v959 = vcombine.low %v927, %v942
    %v960 = vcombine.high %v927, %v942
    %v962 = vunpack.c.l.s4 1934713408
    %v963 = vunpack.c.0.s8 %v962
    %v964 = vlaneseq
    %v965 = vshrl.u32 %v964, 7
    %v966 = vsub.s32 %v963, %v965
    %v967 = vrot.slane %v959, %v966
    %v969 = vunpack.c.l.s4 1934713408
    %v970 = vunpack.c.0.s8 %v969
    %v971 = vlaneseq
    %v972 = vshrl.u32 %v971, 7
    %v973 = vsub.s32 %v970, %v972
    %v974 = vrot.slane %v960, %v973
    %v975 = vcombine.high %v951, 0
    %v976 = vcombine.high %v958, 0
    %v977 = vcombine.high %v967, 0
    %v978 = vcombine.high %v974, 0
    %v979 = vcombine.low %v884, %v891
    %v981 = vunpack.c.l.s4 1983009808
    %v982 = vunpack.c.0.s8 %v981
    %v983 = vlaneseq
    %v984 = vshrl.u32 %v983, 7
    %v985 = vsub.s32 %v982, %v984
    %v986 = vrot.slane %v979, %v985
    %v987 = vcombine.low %v908, %v909
    %v989 = vunpack.c.l.s4 1983009808
    %v990 = vunpack.c.0.s8 %v989
    %v991 = vlaneseq
    %v992 = vshrl.u32 %v991, 7
    %v993 = vsub.s32 %v990, %v992
    %v994 = vrot.slane %v987, %v993
    %v995 = vcombine.low %v986, %v994
    %v996 = vcombine.high %v986, %v994
    %v998 = vunpack.c.l.s4 1934713408
    %v999 = vunpack.c.0.s8 %v998
    %v1000 = vlaneseq
    %v1001 = vshrl.u32 %v1000, 7
    %v1002 = vsub.s32 %v999, %v1001
    %v1003 = vrot.slane %v995, %v1002
    %v1004 = vcombine.high %v1003, 0
    %v1006 = vunpack.c.l.s4 1934713408
    %v1007 = vunpack.c.0.s8 %v1006
    %v1008 = vlaneseq
    %v1009 = vshrl.u32 %v1008, 7
    %v1010 = vsub.s32 %v1007, %v1009
    %v1011 = vrot.slane %v996, %v1010
    %v1012 = vcombine.low %v951, %v958
    %v1014 = vunpack.c.l.s4 1983009808
    %v1015 = vunpack.c.0.s8 %v1014
    %v1016 = vlaneseq
    %v1017 = vshrl.u32 %v1016, 7
    %v1018 = vsub.s32 %v1015, %v1017
    %v1019 = vrot.slane %v1012, %v1018
    %v1020 = vcombine.low %v975, %v976
    %v1022 = vunpack.c.l.s4 1983009808
    %v1023 = vunpack.c.0.s8 %v1022
    %v1024 = vlaneseq
    %v1025 = vshrl.u32 %v1024, 7
    %v1026 = vsub.s32 %v1023, %v1025
    %v1027 = vrot.slane %v1020, %v1026
    %v1028 = vcombine.low %v1019, %v1027
    %v1029 = vcombine.high %v1019, %v1027
    %v1031 = vunpack.c.l.s4 1934713408
    %v1032 = vunpack.c.0.s8 %v1031
    %v1033 = vlaneseq
    %v1034 = vshrl.u32 %v1033, 7
    %v1035 = vsub.s32 %v1032, %v1034
    %v1036 = vrot.slane %v1028, %v1035
    %v1037 = vcombine.high %v1036, 0
    %v1039 = vunpack.c.l.s4 1934713408
    %v1040 = vunpack.c.0.s8 %v1039
    %v1041 = vlaneseq
    %v1042 = vshrl.u32 %v1041, 7
    %v1043 = vsub.s32 %v1040, %v1042
    %v1044 = vrot.slane %v1029, %v1043
    %v1045 = vcombine.low %v900, %v907
    %v1047 = vunpack.c.l.s4 1983009808
    %v1048 = vunpack.c.0.s8 %v1047
    %v1049 = vlaneseq
    %v1050 = vshrl.u32 %v1049, 7
    %v1051 = vsub.s32 %v1048, %v1050
    %v1052 = vrot.slane %v1045, %v1051
    %v1053 = vcombine.low %v910, %v911
    %v1055 = vunpack.c.l.s4 1983009808
    %v1056 = vunpack.c.0.s8 %v1055
    %v1057 = vlaneseq
    %v1058 = vshrl.u32 %v1057, 7
    %v1059 = vsub.s32 %v1056, %v1058
    %v1060 = vrot.slane %v1053, %v1059
    %v1061 = vcombine.low %v1052, %v1060
    %v1062 = vcombine.high %v1052, %v1060
    %v1064 = vunpack.c.l.s4 1934713408
    %v1065 = vunpack.c.0.s8 %v1064
    %v1066 = vlaneseq
    %v1067 = vshrl.u32 %v1066, 7
    %v1068 = vsub.s32 %v1065, %v1067
    %v1069 = vrot.slane %v1061, %v1068
    %v1070 = vcombine.high %v1069, 0
    %v1072 = vunpack.c.l.s4 1934713408
    %v1073 = vunpack.c.0.s8 %v1072
    %v1074 = vlaneseq
    %v1075 = vshrl.u32 %v1074, 7
    %v1076 = vsub.s32 %v1073, %v1075
    %v1077 = vrot.slane %v1062, %v1076
    %v1078 = vcombine.low %v967, %v974
    %v1080 = vunpack.c.l.s4 1983009808
    %v1081 = vunpack.c.0.s8 %v1080
    %v1082 = vlaneseq
    %v1083 = vshrl.u32 %v1082, 7
    %v1084 = vsub.s32 %v1081, %v1083
    %v1085 = vrot.slane %v1078, %v1084
    %v1086 = vcombine.low %v977, %v978
    %v1088 = vunpack.c.l.s4 1983009808
    %v1089 = vunpack.c.0.s8 %v1088
    %v1090 = vlaneseq
    %v1091 = vshrl.u32 %v1090, 7
    %v1092 = vsub.s32 %v1089, %v1091
    %v1093 = vrot.slane %v1086, %v1092
    %v1094 = vcombine.low %v1085, %v1093
    %v1095 = vcombine.high %v1085, %v1093
    %v1097 = vunpack.c.l.s4 1934713408
    %v1098 = vunpack.c.0.s8 %v1097
    %v1099 = vlaneseq
    %v1100 = vshrl.u32 %v1099, 7
    %v1101 = vsub.s32 %v1098, %v1100
    %v1102 = vrot.slane %v1094, %v1101
    %v1103 = vcombine.high %v1102, 0
    %v1105 = vunpack.c.l.s4 1934713408
    %v1106 = vunpack.c.0.s8 %v1105
    %v1107 = vlaneseq
    %v1108 = vshrl.u32 %v1107, 7
    %v1109 = vsub.s32 %v1106, %v1108
    %v1110 = vrot.slane %v1095, %v1109
    %v1113 = vpack.i.b16 %v1036, %v1003
    %v1114 = vshrl.u32 %v1003, 16
    %v1115 = vshrl.u32 %v1036, 16
    %v1116 = vpack.i.b16 %v1115, %v1114
    %v1119 = vpack.i.b16 %v1037, %v1004
    %v1120 = vshrl.u32 %v1004, 16
    %v1121 = vshrl.u32 %v1037, 16
    %v1122 = vpack.i.b16 %v1121, %v1120
    %v1125 = vpack.i.b16 %v1044, %v1011
    %v1126 = vshrl.u32 %v1011, 16
    %v1127 = vshrl.u32 %v1044, 16
    %v1128 = vpack.i.b16 %v1127, %v1126
    %v1131 = vpack.i.b16 %v1102, %v1069
    %v1132 = vshrl.u32 %v1069, 16
    %v1133 = vshrl.u32 %v1102, 16
    %v1134 = vpack.i.b16 %v1133, %v1132
    %v1137 = vpack.i.b16 %v1103, %v1070
    %v1138 = vshrl.u32 %v1070, 16
    %v1139 = vshrl.u32 %v1103, 16
    %v1140 = vpack.i.b16 %v1139, %v1138
    %v1143 = vpack.i.b16 %v1110, %v1077
    %v1144 = vshrl.u32 %v1077, 16
    %v1145 = vshrl.u32 %v1110, 16
    %v1146 = vpack.i.b16 %v1145, %v1144
    %v1147 = vlaneseq
    %v1148 = vshrl.u32 %v1147, 7
    %v1149 = vlaneseq
    %v1150 = vand.u32 %v1149, 127
    %vm1151 = vcmp.ge.s32.totalorder %v1148, %v1150
    %vm1152 = vcmask 39936
    %v1154 = vsel %vm1152, %v437, 0
    %v1157 = vsel %vm1152, %v775, 0
    %1159 = vmatprep.subr.bf16.mxu0 0
    %1160 = vmatpush1.bf16.xpose.msra.mxu0 %v1157
    %1161 = vmatprep.subr.bf16.mxu0 0
    %1162 = vmatpush1.bf16.xpose.msra.mxu0 0
    %1163 = vmatprep.subr.bf16.mxu0 0
    %1164 = vmatpush1.bf16.xpose.msra.mxu0 0
    %1165 = vmatprep.subr.bf16.mxu0 0
    %1166 = vmatpush1.bf16.xpose.msra.mxu0 0
    %1167 = vmatprep.subr.bf16.mxu0 0
    %1168 = vmatpush1.bf16.xpose.msra.mxu0 0
    %1169 = vmatprep.subr.bf16.mxu0 0
    %1170 = vmatpush1.bf16.xpose.msra.mxu0 0
    %1171 = vmatprep.subr.bf16.mxu0 0
    %1172 = vmatpush1.bf16.xpose.msra.mxu0 0
    %1173 = vmatprep.subr.bf16.mxu0 0
    %1174 = vmatpush1.bf16.xpose.msra.mxu0 0
    %1175 = vmatprep.subr.bf16.mxu0 0
    %1176 = vmatpush1.bf16.xpose.msra.mxu0 0
    %1177 = vmatprep.subr.bf16.mxu0 0
    %1178 = vmatpush1.bf16.xpose.msra.mxu0 0
    %1179 = vmatprep.subr.bf16.mxu0 0
    %1180 = vmatpush1.bf16.xpose.msra.mxu0 0
    %1181 = vmatprep.subr.bf16.mxu0 0
    %1182 = vmatpush1.bf16.xpose.msra.mxu0 0
    %1183 = vmatprep.subr.bf16.mxu0 0
    %1184 = vmatpush1.bf16.xpose.msra.mxu0 0
    %1185 = vmatprep.subr.bf16.mxu0 0
    %1186 = vmatpush1.bf16.xpose.msra.mxu0 0
    %1187 = vmatprep.subr.bf16.mxu0 0
    %1188 = vmatpush1.bf16.xpose.msra.mxu0 0
    %1189 = vmatprep.subr.bf16.mxu0 0
    %1190 = vmatpush1.bf16.xpose.msra.mxu0 0
    %1191 = vmatprep.mubr.bf16.mxu0 0
    %1192 = vmatmul.mubr.bf16.gmra.mrb[0].mxu0 %v1154
    %v1193 = vpop.f32.mrb[0].mxu0
    %v1194 = vadd.f32 0.0, %v1193
    %v1195 = vpop.f32.mrb[0].mxu0
    %v1196 = vpop.f32.mrb[0].mxu0
    %v1197 = vpop.f32.mrb[0].mxu0
    %1198 = vdwg.mxu0
    %v1200 = vsel %vm1152, %v440, 0
    %v1203 = vsel %vm1152, %v778, 0
    %1205 = vmatprep.subr.bf16.mxu0 0
    %1206 = vmatpush1.bf16.xpose.msra.mxu0 %v1203
    %1207 = vmatprep.subr.bf16.mxu0 0
    %1208 = vmatpush1.bf16.xpose.msra.mxu0 0
    %1209 = vmatprep.subr.bf16.mxu0 0
    %1210 = vmatpush1.bf16.xpose.msra.mxu0 0
    %1211 = vmatprep.subr.bf16.mxu0 0
    %1212 = vmatpush1.bf16.xpose.msra.mxu0 0
    %1213 = vmatprep.subr.bf16.mxu0 0
    %1214 = vmatpush1.bf16.xpose.msra.mxu0 0
    %1215 = vmatprep.subr.bf16.mxu0 0
    %1216 = vmatpush1.bf16.xpose.msra.mxu0 0
    %1217 = vmatprep.subr.bf16.mxu0 0
    %1218 = vmatpush1.bf16.xpose.msra.mxu0 0
    %1219 = vmatprep.subr.bf16.mxu0 0
    %1220 = vmatpush1.bf16.xpose.msra.mxu0 0
    %1221 = vmatprep.subr.bf16.mxu0 0
    %1222 = vmatpush1.bf16.xpose.msra.mxu0 0
    %1223 = vmatprep.subr.bf16.mxu0 0
    %1224 = vmatpush1.bf16.xpose.msra.mxu0 0
    %1225 = vmatprep.subr.bf16.mxu0 0
    %1226 = vmatpush1.bf16.xpose.msra.mxu0 0
    %1227 = vmatprep.subr.bf16.mxu0 0
    %1228 = vmatpush1.bf16.xpose.msra.mxu0 0
    %1229 = vmatprep.subr.bf16.mxu0 0
    %1230 = vmatpush1.bf16.xpose.msra.mxu0 0
    %1231 = vmatprep.subr.bf16.mxu0 0
    %1232 = vmatpush1.bf16.xpose.msra.mxu0 0
    %1233 = vmatprep.subr.bf16.mxu0 0
    %1234 = vmatpush1.bf16.xpose.msra.mxu0 0
    %1235 = vmatprep.subr.bf16.mxu0 0
    %1236 = vmatpush1.bf16.xpose.msra.mxu0 0
    %1237 = vmatprep.mubr.bf16.mxu0 0
    %1238 = vmatmul.mubr.bf16.gmra.mrb[0].mxu0 %v1200
    %v1239 = vpop.f32.mrb[0].mxu0
    %v1240 = vadd.f32 0.0, %v1239
    %v1241 = vpop.f32.mrb[0].mxu0
    %v1242 = vpop.f32.mrb[0].mxu0
    %v1243 = vpop.f32.mrb[0].mxu0
    %1244 = vdwg.mxu0
    %v1246 = vsel %vm1152, %v443, 0
    %v1249 = vsel %vm1152, %v781, 0
    %1251 = vmatprep.subr.bf16.mxu0 0
    %1252 = vmatpush1.bf16.xpose.msra.mxu0 %v1249
    %1253 = vmatprep.subr.bf16.mxu0 0
    %1254 = vmatpush1.bf16.xpose.msra.mxu0 0
    %1255 = vmatprep.subr.bf16.mxu0 0
    %1256 = vmatpush1.bf16.xpose.msra.mxu0 0
    %1257 = vmatprep.subr.bf16.mxu0 0
    %1258 = vmatpush1.bf16.xpose.msra.mxu0 0
    %1259 = vmatprep.subr.bf16.mxu0 0
    %1260 = vmatpush1.bf16.xpose.msra.mxu0 0
    %1261 = vmatprep.subr.bf16.mxu0 0
    %1262 = vmatpush1.bf16.xpose.msra.mxu0 0
    %1263 = vmatprep.subr.bf16.mxu0 0
    %1264 = vmatpush1.bf16.xpose.msra.mxu0 0
    %1265 = vmatprep.subr.bf16.mxu0 0
    %1266 = vmatpush1.bf16.xpose.msra.mxu0 0
    %1267 = vmatprep.subr.bf16.mxu0 0
    %1268 = vmatpush1.bf16.xpose.msra.mxu0 0
    %1269 = vmatprep.subr.bf16.mxu0 0
    %1270 = vmatpush1.bf16.xpose.msra.mxu0 0
    %1271 = vmatprep.subr.bf16.mxu0 0
    %1272 = vmatpush1.bf16.xpose.msra.mxu0 0
    %1273 = vmatprep.subr.bf16.mxu0 0
    %1274 = vmatpush1.bf16.xpose.msra.mxu0 0
    %1275 = vmatprep.subr.bf16.mxu0 0
    %1276 = vmatpush1.bf16.xpose.msra.mxu0 0
    %1277 = vmatprep.subr.bf16.mxu0 0
    %1278 = vmatpush1.bf16.xpose.msra.mxu0 0
    %1279 = vmatprep.subr.bf16.mxu0 0
    %1280 = vmatpush1.bf16.xpose.msra.mxu0 0
    %1281 = vmatprep.subr.bf16.mxu0 0
    %1282 = vmatpush1.bf16.xpose.msra.mxu0 0
    %1283 = vmatprep.mubr.bf16.mxu0 0
    %1284 = vmatmul.mubr.bf16.gmra.mrb[0].mxu0 %v1246
    %v1285 = vpop.f32.mrb[0].mxu0
    %v1286 = vadd.f32 0.0, %v1285
    %v1287 = vpop.f32.mrb[0].mxu0
    %v1288 = vpop.f32.mrb[0].mxu0
    %v1289 = vpop.f32.mrb[0].mxu0
    %1290 = vdwg.mxu0
    %v1292 = vsel %vm1152, %v446, 0
    %v1295 = vsel %vm1152, %v784, 0
    %1297 = vmatprep.subr.bf16.mxu0 0
    %1298 = vmatpush1.bf16.xpose.msra.mxu0 %v1295
    %1299 = vmatprep.subr.bf16.mxu0 0
    %1300 = vmatpush1.bf16.xpose.msra.mxu0 0
    %1301 = vmatprep.subr.bf16.mxu0 0
    %1302 = vmatpush1.bf16.xpose.msra.mxu0 0
    %1303 = vmatprep.subr.bf16.mxu0 0
    %1304 = vmatpush1.bf16.xpose.msra.mxu0 0
    %1305 = vmatprep.subr.bf16.mxu0 0
    %1306 = vmatpush1.bf16.xpose.msra.mxu0 0
    %1307 = vmatprep.subr.bf16.mxu0 0
    %1308 = vmatpush1.bf16.xpose.msra.mxu0 0
    %1309 = vmatprep.subr.bf16.mxu0 0
    %1310 = vmatpush1.bf16.xpose.msra.mxu0 0
    %1311 = vmatprep.subr.bf16.mxu0 0
    %1312 = vmatpush1.bf16.xpose.msra.mxu0 0
    %1313 = vmatprep.subr.bf16.mxu0 0
    %1314 = vmatpush1.bf16.xpose.msra.mxu0 0
    %1315 = vmatprep.subr.bf16.mxu0 0
    %1316 = vmatpush1.bf16.xpose.msra.mxu0 0
    %1317 = vmatprep.subr.bf16.mxu0 0
    %1318 = vmatpush1.bf16.xpose.msra.mxu0 0
    %1319 = vmatprep.subr.bf16.mxu0 0
    %1320 = vmatpush1.bf16.xpose.msra.mxu0 0
    %1321 = vmatprep.subr.bf16.mxu0 0
    %1322 = vmatpush1.bf16.xpose.msra.mxu0 0
    %1323 = vmatprep.subr.bf16.mxu0 0
    %1324 = vmatpush1.bf16.xpose.msra.mxu0 0
    %1325 = vmatprep.subr.bf16.mxu0 0
    %1326 = vmatpush1.bf16.xpose.msra.mxu0 0
    %1327 = vmatprep.subr.bf16.mxu0 0
    %1328 = vmatpush1.bf16.xpose.msra.mxu0 0
    %1329 = vmatprep.mubr.bf16.mxu0 0
    %1330 = vmatmul.mubr.bf16.gmra.mrb[0].mxu0 %v1292
    %v1331 = vpop.f32.mrb[0].mxu0
    %v1332 = vadd.f32 0.0, %v1331
    %v1333 = vpop.f32.mrb[0].mxu0
    %v1334 = vpop.f32.mrb[0].mxu0
    %v1335 = vpop.f32.mrb[0].mxu0
    %1336 = vdwg.mxu0
    %v1338 = vsel %vm1152, %v449, 0
    %v1341 = vsel %vm1152, %v787, 0
    %1343 = vmatprep.subr.bf16.mxu0 0
    %1344 = vmatpush1.bf16.xpose.msra.mxu0 %v1341
    %1345 = vmatprep.subr.bf16.mxu0 0
    %1346 = vmatpush1.bf16.xpose.msra.mxu0 0
    %1347 = vmatprep.subr.bf16.mxu0 0
    %1348 = vmatpush1.bf16.xpose.msra.mxu0 0
    %1349 = vmatprep.subr.bf16.mxu0 0
    %1350 = vmatpush1.bf16.xpose.msra.mxu0 0
    %1351 = vmatprep.subr.bf16.mxu0 0
    %1352 = vmatpush1.bf16.xpose.msra.mxu0 0
    %1353 = vmatprep.subr.bf16.mxu0 0
    %1354 = vmatpush1.bf16.xpose.msra.mxu0 0
    %1355 = vmatprep.subr.bf16.mxu0 0
    %1356 = vmatpush1.bf16.xpose.msra.mxu0 0
    %1357 = vmatprep.subr.bf16.mxu0 0
    %1358 = vmatpush1.bf16.xpose.msra.mxu0 0
    %1359 = vmatprep.subr.bf16.mxu0 0
    %1360 = vmatpush1.bf16.xpose.msra.mxu0 0
    %1361 = vmatprep.subr.bf16.mxu0 0
    %1362 = vmatpush1.bf16.xpose.msra.mxu0 0
    %1363 = vmatprep.subr.bf16.mxu0 0
    %1364 = vmatpush1.bf16.xpose.msra.mxu0 0
    %1365 = vmatprep.subr.bf16.mxu0 0
    %1366 = vmatpush1.bf16.xpose.msra.mxu0 0
    %1367 = vmatprep.subr.bf16.mxu0 0
    %1368 = vmatpush1.bf16.xpose.msra.mxu0 0
    %1369 = vmatprep.subr.bf16.mxu0 0
    %1370 = vmatpush1.bf16.xpose.msra.mxu0 0
    %1371 = vmatprep.subr.bf16.mxu0 0
    %1372 = vmatpush1.bf16.xpose.msra.mxu0 0
    %1373 = vmatprep.subr.bf16.mxu0 0
    %1374 = vmatpush1.bf16.xpose.msra.mxu0 0
    %1375 = vmatprep.mubr.bf16.mxu0 0
    %1376 = vmatmul.mubr.bf16.gmra.mrb[0].mxu0 %v1338
    %v1377 = vpop.f32.mrb[0].mxu0
    %v1378 = vadd.f32 0.0, %v1377
    %v1379 = vpop.f32.mrb[0].mxu0
    %v1380 = vpop.f32.mrb[0].mxu0
    %v1381 = vpop.f32.mrb[0].mxu0
    %1382 = vdwg.mxu0
    %v1384 = vsel %vm1152, %v452, 0
    %v1387 = vsel %vm1152, %v790, 0
    %1389 = vmatprep.subr.bf16.mxu0 0
    %1390 = vmatpush1.bf16.xpose.msra.mxu0 %v1387
    %1391 = vmatprep.subr.bf16.mxu0 0
    %1392 = vmatpush1.bf16.xpose.msra.mxu0 0
    %1393 = vmatprep.subr.bf16.mxu0 0
    %1394 = vmatpush1.bf16.xpose.msra.mxu0 0
    %1395 = vmatprep.subr.bf16.mxu0 0
    %1396 = vmatpush1.bf16.xpose.msra.mxu0 0
    %1397 = vmatprep.subr.bf16.mxu0 0
    %1398 = vmatpush1.bf16.xpose.msra.mxu0 0
    %1399 = vmatprep.subr.bf16.mxu0 0
    %1400 = vmatpush1.bf16.xpose.msra.mxu0 0
    %1401 = vmatprep.subr.bf16.mxu0 0
    %1402 = vmatpush1.bf16.xpose.msra.mxu0 0
    %1403 = vmatprep.subr.bf16.mxu0 0
    %1404 = vmatpush1.bf16.xpose.msra.mxu0 0
    %1405 = vmatprep.subr.bf16.mxu0 0
    %1406 = vmatpush1.bf16.xpose.msra.mxu0 0
    %1407 = vmatprep.subr.bf16.mxu0 0
    %1408 = vmatpush1.bf16.xpose.msra.mxu0 0
    %1409 = vmatprep.subr.bf16.mxu0 0
    %1410 = vmatpush1.bf16.xpose.msra.mxu0 0
    %1411 = vmatprep.subr.bf16.mxu0 0
    %1412 = vmatpush1.bf16.xpose.msra.mxu0 0
    %1413 = vmatprep.subr.bf16.mxu0 0
    %1414 = vmatpush1.bf16.xpose.msra.mxu0 0
    %1415 = vmatprep.subr.bf16.mxu0 0
    %1416 = vmatpush1.bf16.xpose.msra.mxu0 0
    %1417 = vmatprep.subr.bf16.mxu0 0
    %1418 = vmatpush1.bf16.xpose.msra.mxu0 0
    %1419 = vmatprep.subr.bf16.mxu0 0
    %1420 = vmatpush1.bf16.xpose.msra.mxu0 0
    %1421 = vmatprep.mubr.bf16.mxu0 0
    %1422 = vmatmul.mubr.bf16.gmra.mrb[0].mxu0 %v1384
    %v1423 = vpop.f32.mrb[0].mxu0
    %v1424 = vadd.f32 0.0, %v1423
    %v1425 = vpop.f32.mrb[0].mxu0
    %v1426 = vpop.f32.mrb[0].mxu0
    %v1427 = vpop.f32.mrb[0].mxu0
    %1428 = vdwg.mxu0
    %v1430 = vsel %vm1152, %v455, 0
    %v1433 = vsel %vm1152, %v793, 0
    %1435 = vmatprep.subr.bf16.mxu0 0
    %1436 = vmatpush1.bf16.xpose.msra.mxu0 %v1433
    %1437 = vmatprep.subr.bf16.mxu0 0
    %1438 = vmatpush1.bf16.xpose.msra.mxu0 0
    %1439 = vmatprep.subr.bf16.mxu0 0
    %1440 = vmatpush1.bf16.xpose.msra.mxu0 0
    %1441 = vmatprep.subr.bf16.mxu0 0
    %1442 = vmatpush1.bf16.xpose.msra.mxu0 0
    %1443 = vmatprep.subr.bf16.mxu0 0
    %1444 = vmatpush1.bf16.xpose.msra.mxu0 0
    %1445 = vmatprep.subr.bf16.mxu0 0
    %1446 = vmatpush1.bf16.xpose.msra.mxu0 0
    %1447 = vmatprep.subr.bf16.mxu0 0
    %1448 = vmatpush1.bf16.xpose.msra.mxu0 0
    %1449 = vmatprep.subr.bf16.mxu0 0
    %1450 = vmatpush1.bf16.xpose.msra.mxu0 0
    %1451 = vmatprep.subr.bf16.mxu0 0
    %1452 = vmatpush1.bf16.xpose.msra.mxu0 0
    %1453 = vmatprep.subr.bf16.mxu0 0
    %1454 = vmatpush1.bf16.xpose.msra.mxu0 0
    %1455 = vmatprep.subr.bf16.mxu0 0
    %1456 = vmatpush1.bf16.xpose.msra.mxu0 0
    %1457 = vmatprep.subr.bf16.mxu0 0
    %1458 = vmatpush1.bf16.xpose.msra.mxu0 0
    %1459 = vmatprep.subr.bf16.mxu0 0
    %1460 = vmatpush1.bf16.xpose.msra.mxu0 0
    %1461 = vmatprep.subr.bf16.mxu0 0
    %1462 = vmatpush1.bf16.xpose.msra.mxu0 0
    %1463 = vmatprep.subr.bf16.mxu0 0
    %1464 = vmatpush1.bf16.xpose.msra.mxu0 0
    %1465 = vmatprep.subr.bf16.mxu0 0
    %1466 = vmatpush1.bf16.xpose.msra.mxu0 0
    %1467 = vmatprep.mubr.bf16.mxu0 0
    %1468 = vmatmul.mubr.bf16.gmra.mrb[0].mxu0 %v1430
    %v1469 = vpop.f32.mrb[0].mxu0
    %v1470 = vadd.f32 0.0, %v1469
    %v1471 = vpop.f32.mrb[0].mxu0
    %v1472 = vpop.f32.mrb[0].mxu0
    %v1473 = vpop.f32.mrb[0].mxu0
    %1474 = vdwg.mxu0
    %v1476 = vsel %vm1152, %v458, 0
    %v1479 = vsel %vm1152, %v796, 0
    %1481 = vmatprep.subr.bf16.mxu0 0
    %1482 = vmatpush1.bf16.xpose.msra.mxu0 %v1479
    %1483 = vmatprep.subr.bf16.mxu0 0
    %1484 = vmatpush1.bf16.xpose.msra.mxu0 0
    %1485 = vmatprep.subr.bf16.mxu0 0
    %1486 = vmatpush1.bf16.xpose.msra.mxu0 0
    %1487 = vmatprep.subr.bf16.mxu0 0
    %1488 = vmatpush1.bf16.xpose.msra.mxu0 0
    %1489 = vmatprep.subr.bf16.mxu0 0
    %1490 = vmatpush1.bf16.xpose.msra.mxu0 0
    %1491 = vmatprep.subr.bf16.mxu0 0
    %1492 = vmatpush1.bf16.xpose.msra.mxu0 0
    %1493 = vmatprep.subr.bf16.mxu0 0
    %1494 = vmatpush1.bf16.xpose.msra.mxu0 0
    %1495 = vmatprep.subr.bf16.mxu0 0
    %1496 = vmatpush1.bf16.xpose.msra.mxu0 0
    %1497 = vmatprep.subr.bf16.mxu0 0
    %1498 = vmatpush1.bf16.xpose.msra.mxu0 0
    %1499 = vmatprep.subr.bf16.mxu0 0
    %1500 = vmatpush1.bf16.xpose.msra.mxu0 0
    %1501 = vmatprep.subr.bf16.mxu0 0
    %1502 = vmatpush1.bf16.xpose.msra.mxu0 0
    %1503 = vmatprep.subr.bf16.mxu0 0
    %1504 = vmatpush1.bf16.xpose.msra.mxu0 0
    %1505 = vmatprep.subr.bf16.mxu0 0
    %1506 = vmatpush1.bf16.xpose.msra.mxu0 0
    %1507 = vmatprep.subr.bf16.mxu0 0
    %1508 = vmatpush1.bf16.xpose.msra.mxu0 0
    %1509 = vmatprep.subr.bf16.mxu0 0
    %1510 = vmatpush1.bf16.xpose.msra.mxu0 0
    %1511 = vmatprep.subr.bf16.mxu0 0
    %1512 = vmatpush1.bf16.xpose.msra.mxu0 0
    %1513 = vmatprep.mubr.bf16.mxu0 0
    %1514 = vmatmul.mubr.bf16.gmra.mrb[0].mxu0 %v1476
    %v1515 = vpop.f32.mrb[0].mxu0
    %v1516 = vadd.f32 0.0, %v1515
    %v1517 = vpop.f32.mrb[0].mxu0
    %v1518 = vpop.f32.mrb[0].mxu0
    %v1519 = vpop.f32.mrb[0].mxu0
    %1520 = vdwg.mxu0
    %v1522 = vsel %vm1152, %v461, 0
    %v1525 = vsel %vm1152, %v799, 0
    %1527 = vmatprep.subr.bf16.mxu0 0
    %1528 = vmatpush1.bf16.xpose.msra.mxu0 %v1525
    %1529 = vmatprep.subr.bf16.mxu0 0
    %1530 = vmatpush1.bf16.xpose.msra.mxu0 0
    %1531 = vmatprep.subr.bf16.mxu0 0
    %1532 = vmatpush1.bf16.xpose.msra.mxu0 0
    %1533 = vmatprep.subr.bf16.mxu0 0
    %1534 = vmatpush1.bf16.xpose.msra.mxu0 0
    %1535 = vmatprep.subr.bf16.mxu0 0
    %1536 = vmatpush1.bf16.xpose.msra.mxu0 0
    %1537 = vmatprep.subr.bf16.mxu0 0
    %1538 = vmatpush1.bf16.xpose.msra.mxu0 0
    %1539 = vmatprep.subr.bf16.mxu0 0
    %1540 = vmatpush1.bf16.xpose.msra.mxu0 0
    %1541 = vmatprep.subr.bf16.mxu0 0
    %1542 = vmatpush1.bf16.xpose.msra.mxu0 0
    %1543 = vmatprep.subr.bf16.mxu0 0
    %1544 = vmatpush1.bf16.xpose.msra.mxu0 0
    %1545 = vmatprep.subr.bf16.mxu0 0
    %1546 = vmatpush1.bf16.xpose.msra.mxu0 0
    %1547 = vmatprep.subr.bf16.mxu0 0
    %1548 = vmatpush1.bf16.xpose.msra.mxu0 0
    %1549 = vmatprep.subr.bf16.mxu0 0
    %1550 = vmatpush1.bf16.xpose.msra.mxu0 0
    %1551 = vmatprep.subr.bf16.mxu0 0
    %1552 = vmatpush1.bf16.xpose.msra.mxu0 0
    %1553 = vmatprep.subr.bf16.mxu0 0
    %1554 = vmatpush1.bf16.xpose.msra.mxu0 0
    %1555 = vmatprep.subr.bf16.mxu0 0
    %1556 = vmatpush1.bf16.xpose.msra.mxu0 0
    %1557 = vmatprep.subr.bf16.mxu0 0
    %1558 = vmatpush1.bf16.xpose.msra.mxu0 0
    %1559 = vmatprep.mubr.bf16.mxu0 0
    %1560 = vmatmul.mubr.bf16.gmra.mrb[0].mxu0 %v1522
    %v1561 = vpop.f32.mrb[0].mxu0
    %v1562 = vadd.f32 0.0, %v1561
    %v1563 = vpop.f32.mrb[0].mxu0
    %v1564 = vpop.f32.mrb[0].mxu0
    %v1565 = vpop.f32.mrb[0].mxu0
    %1566 = vdwg.mxu0
    %v1568 = vsel %vm1152, %v464, 0
    %v1571 = vsel %vm1152, %v802, 0
    %1573 = vmatprep.subr.bf16.mxu0 0
    %1574 = vmatpush1.bf16.xpose.msra.mxu0 %v1571
    %1575 = vmatprep.subr.bf16.mxu0 0
    %1576 = vmatpush1.bf16.xpose.msra.mxu0 0
    %1577 = vmatprep.subr.bf16.mxu0 0
    %1578 = vmatpush1.bf16.xpose.msra.mxu0 0
    %1579 = vmatprep.subr.bf16.mxu0 0
    %1580 = vmatpush1.bf16.xpose.msra.mxu0 0
    %1581 = vmatprep.subr.bf16.mxu0 0
    %1582 = vmatpush1.bf16.xpose.msra.mxu0 0
    %1583 = vmatprep.subr.bf16.mxu0 0
    %1584 = vmatpush1.bf16.xpose.msra.mxu0 0
    %1585 = vmatprep.subr.bf16.mxu0 0
    %1586 = vmatpush1.bf16.xpose.msra.mxu0 0
    %1587 = vmatprep.subr.bf16.mxu0 0
    %1588 = vmatpush1.bf16.xpose.msra.mxu0 0
    %1589 = vmatprep.subr.bf16.mxu0 0
    %1590 = vmatpush1.bf16.xpose.msra.mxu0 0
    %1591 = vmatprep.subr.bf16.mxu0 0
    %1592 = vmatpush1.bf16.xpose.msra.mxu0 0
    %1593 = vmatprep.subr.bf16.mxu0 0
    %1594 = vmatpush1.bf16.xpose.msra.mxu0 0
    %1595 = vmatprep.subr.bf16.mxu0 0
    %1596 = vmatpush1.bf16.xpose.msra.mxu0 0
    %1597 = vmatprep.subr.bf16.mxu0 0
    %1598 = vmatpush1.bf16.xpose.msra.mxu0 0
    %1599 = vmatprep.subr.bf16.mxu0 0
    %1600 = vmatpush1.bf16.xpose.msra.mxu0 0
    %1601 = vmatprep.subr.bf16.mxu0 0
    %1602 = vmatpush1.bf16.xpose.msra.mxu0 0
    %1603 = vmatprep.subr.bf16.mxu0 0
    %1604 = vmatpush1.bf16.xpose.msra.mxu0 0
    %1605 = vmatprep.mubr.bf16.mxu0 0
    %1606 = vmatmul.mubr.bf16.gmra.mrb[0].mxu0 %v1568
    %v1607 = vpop.f32.mrb[0].mxu0
    %v1608 = vadd.f32 0.0, %v1607
    %v1609 = vpop.f32.mrb[0].mxu0
    %v1610 = vpop.f32.mrb[0].mxu0
    %v1611 = vpop.f32.mrb[0].mxu0
    %1612 = vdwg.mxu0
    %v1614 = vsel %vm1152, %v467, 0
    %v1617 = vsel %vm1152, %v805, 0
    %1619 = vmatprep.subr.bf16.mxu0 0
    %1620 = vmatpush1.bf16.xpose.msra.mxu0 %v1617
    %1621 = vmatprep.subr.bf16.mxu0 0
    %1622 = vmatpush1.bf16.xpose.msra.mxu0 0
    %1623 = vmatprep.subr.bf16.mxu0 0
    %1624 = vmatpush1.bf16.xpose.msra.mxu0 0
    %1625 = vmatprep.subr.bf16.mxu0 0
    %1626 = vmatpush1.bf16.xpose.msra.mxu0 0
    %1627 = vmatprep.subr.bf16.mxu0 0
    %1628 = vmatpush1.bf16.xpose.msra.mxu0 0
    %1629 = vmatprep.subr.bf16.mxu0 0
    %1630 = vmatpush1.bf16.xpose.msra.mxu0 0
    %1631 = vmatprep.subr.bf16.mxu0 0
    %1632 = vmatpush1.bf16.xpose.msra.mxu0 0
    %1633 = vmatprep.subr.bf16.mxu0 0
    %1634 = vmatpush1.bf16.xpose.msra.mxu0 0
    %1635 = vmatprep.subr.bf16.mxu0 0
    %1636 = vmatpush1.bf16.xpose.msra.mxu0 0
    %1637 = vmatprep.subr.bf16.mxu0 0
    %1638 = vmatpush1.bf16.xpose.msra.mxu0 0
    %1639 = vmatprep.subr.bf16.mxu0 0
    %1640 = vmatpush1.bf16.xpose.msra.mxu0 0
    %1641 = vmatprep.subr.bf16.mxu0 0
    %1642 = vmatpush1.bf16.xpose.msra.mxu0 0
    %1643 = vmatprep.subr.bf16.mxu0 0
    %1644 = vmatpush1.bf16.xpose.msra.mxu0 0
    %1645 = vmatprep.subr.bf16.mxu0 0
    %1646 = vmatpush1.bf16.xpose.msra.mxu0 0
    %1647 = vmatprep.subr.bf16.mxu0 0
    %1648 = vmatpush1.bf16.xpose.msra.mxu0 0
    %1649 = vmatprep.subr.bf16.mxu0 0
    %1650 = vmatpush1.bf16.xpose.msra.mxu0 0
    %1651 = vmatprep.mubr.bf16.mxu0 0
    %1652 = vmatmul.mubr.bf16.gmra.mrb[0].mxu0 %v1614
    %v1653 = vpop.f32.mrb[0].mxu0
    %v1654 = vadd.f32 0.0, %v1653
    %v1655 = vpop.f32.mrb[0].mxu0
    %v1656 = vpop.f32.mrb[0].mxu0
    %v1657 = vpop.f32.mrb[0].mxu0
    %1658 = vdwg.mxu0
    %v1660 = vsel %vm1152, %v470, 0
    %v1663 = vsel %vm1152, %v808, 0
    %1665 = vmatprep.subr.bf16.mxu0 0
    %1666 = vmatpush1.bf16.xpose.msra.mxu0 %v1663
    %1667 = vmatprep.subr.bf16.mxu0 0
    %1668 = vmatpush1.bf16.xpose.msra.mxu0 0
    %1669 = vmatprep.subr.bf16.mxu0 0
    %1670 = vmatpush1.bf16.xpose.msra.mxu0 0
    %1671 = vmatprep.subr.bf16.mxu0 0
    %1672 = vmatpush1.bf16.xpose.msra.mxu0 0
    %1673 = vmatprep.subr.bf16.mxu0 0
    %1674 = vmatpush1.bf16.xpose.msra.mxu0 0
    %1675 = vmatprep.subr.bf16.mxu0 0
    %1676 = vmatpush1.bf16.xpose.msra.mxu0 0
    %1677 = vmatprep.subr.bf16.mxu0 0
    %1678 = vmatpush1.bf16.xpose.msra.mxu0 0
    %1679 = vmatprep.subr.bf16.mxu0 0
    %1680 = vmatpush1.bf16.xpose.msra.mxu0 0
    %1681 = vmatprep.subr.bf16.mxu0 0
    %1682 = vmatpush1.bf16.xpose.msra.mxu0 0
    %1683 = vmatprep.subr.bf16.mxu0 0
    %1684 = vmatpush1.bf16.xpose.msra.mxu0 0
    %1685 = vmatprep.subr.bf16.mxu0 0
    %1686 = vmatpush1.bf16.xpose.msra.mxu0 0
    %1687 = vmatprep.subr.bf16.mxu0 0
    %1688 = vmatpush1.bf16.xpose.msra.mxu0 0
    %1689 = vmatprep.subr.bf16.mxu0 0
    %1690 = vmatpush1.bf16.xpose.msra.mxu0 0
    %1691 = vmatprep.subr.bf16.mxu0 0
    %1692 = vmatpush1.bf16.xpose.msra.mxu0 0
    %1693 = vmatprep.subr.bf16.mxu0 0
    %1694 = vmatpush1.bf16.xpose.msra.mxu0 0
    %1695 = vmatprep.subr.bf16.mxu0 0
    %1696 = vmatpush1.bf16.xpose.msra.mxu0 0
    %1697 = vmatprep.mubr.bf16.mxu0 0
    %1698 = vmatmul.mubr.bf16.gmra.mrb[0].mxu0 %v1660
    %v1699 = vpop.f32.mrb[0].mxu0
    %v1700 = vadd.f32 0.0, %v1699
    %v1701 = vpop.f32.mrb[0].mxu0
    %v1702 = vpop.f32.mrb[0].mxu0
    %v1703 = vpop.f32.mrb[0].mxu0
    %1704 = vdwg.mxu0
    %v1705 = vsel %vm1151, 1, 0
    %vm1706 = vcmp.eq.s32.totalorder %v1705, 1
    %v1707 = vsel %vm1706, %v1194, -inf
    %v1708 = vsel %vm1706, %v1240, -inf
    %v1709 = vsel %vm1706, %v1286, -inf
    %v1710 = vsel %vm1706, %v1332, -inf
    %v1711 = vsel %vm1706, %v1378, -inf
    %v1712 = vsel %vm1706, %v1424, -inf
    %v1713 = vsel %vm1706, %v1470, -inf
    %v1714 = vsel %vm1706, %v1516, -inf
    %v1715 = vsel %vm1706, %v1562, -inf
    %v1716 = vsel %vm1706, %v1608, -inf
    %v1717 = vsel %vm1706, %v1654, -inf
    %v1718 = vsel %vm1706, %v1700, -inf
    %vm1719 = vcmask 64512
    %v1720 = vsel %vm1719, %v1707, -inf
    %v1721 = vrot.slane %v1720, 4
    %v1722 = vmax.f32 %v1720, %v1721
    %v1723 = vrot.slane %v1722, 2
    %v1724 = vmax.f32 %v1722, %v1723
    %v1725 = vrot.slane %v1724, 1
    %v1726 = vmax.f32 %v1724, %v1725
    %v1727 = vsel %vm1719, %v1708, -inf
    %v1728 = vrot.slane %v1727, 4
    %v1729 = vmax.f32 %v1727, %v1728
    %v1730 = vrot.slane %v1729, 2
    %v1731 = vmax.f32 %v1729, %v1730
    %v1732 = vrot.slane %v1731, 1
    %v1733 = vmax.f32 %v1731, %v1732
    %v1734 = vsel %vm1719, %v1709, -inf
    %v1735 = vrot.slane %v1734, 4
    %v1736 = vmax.f32 %v1734, %v1735
    %v1737 = vrot.slane %v1736, 2
    %v1738 = vmax.f32 %v1736, %v1737
    %v1739 = vrot.slane %v1738, 1
    %v1740 = vmax.f32 %v1738, %v1739
    %v1741 = vsel %vm1719, %v1710, -inf
    %v1742 = vrot.slane %v1741, 4
    %v1743 = vmax.f32 %v1741, %v1742
    %v1744 = vrot.slane %v1743, 2
    %v1745 = vmax.f32 %v1743, %v1744
    %v1746 = vrot.slane %v1745, 1
    %v1747 = vmax.f32 %v1745, %v1746
    %v1748 = vsel %vm1719, %v1711, -inf
    %v1749 = vrot.slane %v1748, 4
    %v1750 = vmax.f32 %v1748, %v1749
    %v1751 = vrot.slane %v1750, 2
    %v1752 = vmax.f32 %v1750, %v1751
    %v1753 = vrot.slane %v1752, 1
    %v1754 = vmax.f32 %v1752, %v1753
    %v1755 = vsel %vm1719, %v1712, -inf
    %v1756 = vrot.slane %v1755, 4
    %v1757 = vmax.f32 %v1755, %v1756
    %v1758 = vrot.slane %v1757, 2
    %v1759 = vmax.f32 %v1757, %v1758
    %v1760 = vrot.slane %v1759, 1
    %v1761 = vmax.f32 %v1759, %v1760
    %v1762 = vsel %vm1719, %v1713, -inf
    %v1763 = vrot.slane %v1762, 4
    %v1764 = vmax.f32 %v1762, %v1763
    %v1765 = vrot.slane %v1764, 2
    %v1766 = vmax.f32 %v1764, %v1765
    %v1767 = vrot.slane %v1766, 1
    %v1768 = vmax.f32 %v1766, %v1767
    %v1769 = vsel %vm1719, %v1714, -inf
    %v1770 = vrot.slane %v1769, 4
    %v1771 = vmax.f32 %v1769, %v1770
    %v1772 = vrot.slane %v1771, 2
    %v1773 = vmax.f32 %v1771, %v1772
    %v1774 = vrot.slane %v1773, 1
    %v1775 = vmax.f32 %v1773, %v1774
    %v1776 = vsel %vm1719, %v1715, -inf
    %v1777 = vrot.slane %v1776, 4
    %v1778 = vmax.f32 %v1776, %v1777
    %v1779 = vrot.slane %v1778, 2
    %v1780 = vmax.f32 %v1778, %v1779
    %v1781 = vrot.slane %v1780, 1
    %v1782 = vmax.f32 %v1780, %v1781
    %v1783 = vsel %vm1719, %v1716, -inf
    %v1784 = vrot.slane %v1783, 4
    %v1785 = vmax.f32 %v1783, %v1784
    %v1786 = vrot.slane %v1785, 2
    %v1787 = vmax.f32 %v1785, %v1786
    %v1788 = vrot.slane %v1787, 1
    %v1789 = vmax.f32 %v1787, %v1788
    %v1790 = vsel %vm1719, %v1717, -inf
    %v1791 = vrot.slane %v1790, 4
    %v1792 = vmax.f32 %v1790, %v1791
    %v1793 = vrot.slane %v1792, 2
    %v1794 = vmax.f32 %v1792, %v1793
    %v1795 = vrot.slane %v1794, 1
    %v1796 = vmax.f32 %v1794, %v1795
    %v1797 = vsel %vm1719, %v1718, -inf
    %v1798 = vrot.slane %v1797, 4
    %v1799 = vmax.f32 %v1797, %v1798
    %v1800 = vrot.slane %v1799, 2
    %v1801 = vmax.f32 %v1799, %v1800
    %v1802 = vrot.slane %v1801, 1
    %v1803 = vmax.f32 %v1801, %v1802
    %v1804 = vsub.f32 %v1707, %v1726
    %v1805 = vsub.f32 %v1708, %v1733
    %v1806 = vsub.f32 %v1709, %v1740
    %v1807 = vsub.f32 %v1710, %v1747
    %v1808 = vsub.f32 %v1711, %v1754
    %v1809 = vsub.f32 %v1712, %v1761
    %v1810 = vsub.f32 %v1713, %v1768
    %v1811 = vsub.f32 %v1714, %v1775
    %v1812 = vsub.f32 %v1715, %v1782
    %v1813 = vsub.f32 %v1716, %v1789
    %v1814 = vsub.f32 %v1717, %v1796
    %v1815 = vsub.f32 %v1718, %v1803
    %v1816 = vmul.f32 %v1804, 1.442695
    %v1817 = vpow.pop %v1816
    %v1818 = vmul.f32 %v1805, 1.442695
    %v1819 = vpow.pop %v1818
    %v1820 = vmul.f32 %v1806, 1.442695
    %v1821 = vpow.pop %v1820
    %v1822 = vmul.f32 %v1807, 1.442695
    %v1823 = vpow.pop %v1822
    %v1824 = vmul.f32 %v1808, 1.442695
    %v1825 = vpow.pop %v1824
    %v1826 = vmul.f32 %v1809, 1.442695
    %v1827 = vpow.pop %v1826
    %v1828 = vmul.f32 %v1810, 1.442695
    %v1829 = vpow.pop %v1828
    %v1830 = vmul.f32 %v1811, 1.442695
    %v1831 = vpow.pop %v1830
    %v1832 = vmul.f32 %v1812, 1.442695
    %v1833 = vpow.pop %v1832
    %v1834 = vmul.f32 %v1813, 1.442695
    %v1835 = vpow.pop %v1834
    %v1836 = vmul.f32 %v1814, 1.442695
    %v1837 = vpow.pop %v1836
    %v1838 = vmul.f32 %v1815, 1.442695
    %v1839 = vpow.pop %v1838
    %v1840 = vsel %vm1719, %v1817, 0.0
    %v1841 = vrot.slane %v1840, 4
    %v1842 = vadd.f32 %v1840, %v1841
    %v1843 = vrot.slane %v1842, 2
    %v1844 = vadd.f32 %v1842, %v1843
    %v1845 = vrot.slane %v1844, 1
    %v1846 = vadd.f32 %v1844, %v1845
    %v1847 = vsel %vm1719, %v1819, 0.0
    %v1848 = vrot.slane %v1847, 4
    %v1849 = vadd.f32 %v1847, %v1848
    %v1850 = vrot.slane %v1849, 2
    %v1851 = vadd.f32 %v1849, %v1850
    %v1852 = vrot.slane %v1851, 1
    %v1853 = vadd.f32 %v1851, %v1852
    %v1854 = vsel %vm1719, %v1821, 0.0
    %v1855 = vrot.slane %v1854, 4
    %v1856 = vadd.f32 %v1854, %v1855
    %v1857 = vrot.slane %v1856, 2
    %v1858 = vadd.f32 %v1856, %v1857
    %v1859 = vrot.slane %v1858, 1
    %v1860 = vadd.f32 %v1858, %v1859
    %v1861 = vsel %vm1719, %v1823, 0.0
    %v1862 = vrot.slane %v1861, 4
    %v1863 = vadd.f32 %v1861, %v1862
    %v1864 = vrot.slane %v1863, 2
    %v1865 = vadd.f32 %v1863, %v1864
    %v1866 = vrot.slane %v1865, 1
    %v1867 = vadd.f32 %v1865, %v1866
    %v1868 = vsel %vm1719, %v1825, 0.0
    %v1869 = vrot.slane %v1868, 4
    %v1870 = vadd.f32 %v1868, %v1869
    %v1871 = vrot.slane %v1870, 2
    %v1872 = vadd.f32 %v1870, %v1871
    %v1873 = vrot.slane %v1872, 1
    %v1874 = vadd.f32 %v1872, %v1873
    %v1875 = vsel %vm1719, %v1827, 0.0
    %v1876 = vrot.slane %v1875, 4
    %v1877 = vadd.f32 %v1875, %v1876
    %v1878 = vrot.slane %v1877, 2
    %v1879 = vadd.f32 %v1877, %v1878
    %v1880 = vrot.slane %v1879, 1
    %v1881 = vadd.f32 %v1879, %v1880
    %v1882 = vsel %vm1719, %v1829, 0.0
    %v1883 = vrot.slane %v1882, 4
    %v1884 = vadd.f32 %v1882, %v1883
    %v1885 = vrot.slane %v1884, 2
    %v1886 = vadd.f32 %v1884, %v1885
    %v1887 = vrot.slane %v1886, 1
    %v1888 = vadd.f32 %v1886, %v1887
    %v1889 = vsel %vm1719, %v1831, 0.0
    %v1890 = vrot.slane %v1889, 4
    %v1891 = vadd.f32 %v1889, %v1890
    %v1892 = vrot.slane %v1891, 2
    %v1893 = vadd.f32 %v1891, %v1892
    %v1894 = vrot.slane %v1893, 1
    %v1895 = vadd.f32 %v1893, %v1894
    %v1896 = vsel %vm1719, %v1833, 0.0
    %v1897 = vrot.slane %v1896, 4
    %v1898 = vadd.f32 %v1896, %v1897
    %v1899 = vrot.slane %v1898, 2
    %v1900 = vadd.f32 %v1898, %v1899
    %v1901 = vrot.slane %v1900, 1
    %v1902 = vadd.f32 %v1900, %v1901
    %v1903 = vsel %vm1719, %v1835, 0.0
    %v1904 = vrot.slane %v1903, 4
    %v1905 = vadd.f32 %v1903, %v1904
    %v1906 = vrot.slane %v1905, 2
    %v1907 = vadd.f32 %v1905, %v1906
    %v1908 = vrot.slane %v1907, 1
    %v1909 = vadd.f32 %v1907, %v1908
    %v1910 = vsel %vm1719, %v1837, 0.0
    %v1911 = vrot.slane %v1910, 4
    %v1912 = vadd.f32 %v1910, %v1911
    %v1913 = vrot.slane %v1912, 2
    %v1914 = vadd.f32 %v1912, %v1913
    %v1915 = vrot.slane %v1914, 1
    %v1916 = vadd.f32 %v1914, %v1915
    %v1917 = vsel %vm1719, %v1839, 0.0
    %v1918 = vrot.slane %v1917, 4
    %v1919 = vadd.f32 %v1917, %v1918
    %v1920 = vrot.slane %v1919, 2
    %v1921 = vadd.f32 %v1919, %v1920
    %v1922 = vrot.slane %v1921, 1
    %v1923 = vadd.f32 %v1921, %v1922
    %v1924 = vrcp.pop %v1846
    %v1925 = vrcp.pop %v1853
    %v1926 = vrcp.pop %v1860
    %v1927 = vrcp.pop %v1867
    %v1928 = vrcp.pop %v1874
    %v1929 = vrcp.pop %v1881
    %v1930 = vrcp.pop %v1888
    %v1931 = vrcp.pop %v1895
    %v1932 = vrcp.pop %v1902
    %v1933 = vrcp.pop %v1909
    %v1934 = vrcp.pop %v1916
    %v1935 = vrcp.pop %v1923
    %v1936 = vmul.f32 %v1817, %v1924
    %v1937 = vmul.f32 %v1819, %v1925
    %v1938 = vmul.f32 %v1821, %v1926
    %v1939 = vmul.f32 %v1823, %v1927
    %v1940 = vmul.f32 %v1825, %v1928
    %v1941 = vmul.f32 %v1827, %v1929
    %v1942 = vmul.f32 %v1829, %v1930
    %v1943 = vmul.f32 %v1831, %v1931
    %v1944 = vmul.f32 %v1833, %v1932
    %v1945 = vmul.f32 %v1835, %v1933
    %v1946 = vmul.f32 %v1837, %v1934
    %v1947 = vmul.f32 %v1839, %v1935
    %v1948 = vpack.c.bf16 %v1936, %v1936
    %v1949 = vpack.c.bf16 %v1937, %v1937
    %v1950 = vpack.c.bf16 %v1938, %v1938
    %v1951 = vpack.c.bf16 %v1939, %v1939
    %v1952 = vpack.c.bf16 %v1940, %v1940
    %v1953 = vpack.c.bf16 %v1941, %v1941
    %v1954 = vpack.c.bf16 %v1942, %v1942
    %v1955 = vpack.c.bf16 %v1943, %v1943
    %v1956 = vpack.c.bf16 %v1944, %v1944
    %v1957 = vpack.c.bf16 %v1945, %v1945
    %v1958 = vpack.c.bf16 %v1946, %v1946
    %v1959 = vpack.c.bf16 %v1947, %v1947
    %v1961 = vsel %vm1719, %v1948, 0
    %vm1963 = vcmask 1043456
    %v1965 = vsel %vm1963, %v1113, 0
    %1967 = vmatprep.subr.bf16.mxu0 0
    %1968 = vmatpush1.bf16.msra.mxu0 %v1965
    %1969 = vmatprep.subr.bf16.mxu0 0
    %1970 = vmatpush1.bf16.msra.mxu0 0
    %1971 = vmatprep.subr.bf16.mxu0 0
    %1972 = vmatpush1.bf16.msra.mxu0 0
    %1973 = vmatprep.subr.bf16.mxu0 0
    %1974 = vmatpush1.bf16.msra.mxu0 0
    %1975 = vmatprep.subr.bf16.mxu0 0
    %1976 = vmatpush1.bf16.msra.mxu0 0
    %1977 = vmatprep.subr.bf16.mxu0 0
    %1978 = vmatpush1.bf16.msra.mxu0 0
    %1979 = vmatprep.subr.bf16.mxu0 0
    %1980 = vmatpush1.bf16.msra.mxu0 0
    %1981 = vmatprep.subr.bf16.mxu0 0
    %1982 = vmatpush1.bf16.msra.mxu0 0
    %1983 = vmatprep.subr.bf16.mxu0 0
    %1984 = vmatpush1.bf16.msra.mxu0 0
    %1985 = vmatprep.subr.bf16.mxu0 0
    %1986 = vmatpush1.bf16.msra.mxu0 0
    %1987 = vmatprep.subr.bf16.mxu0 0
    %1988 = vmatpush1.bf16.msra.mxu0 0
    %1989 = vmatprep.subr.bf16.mxu0 0
    %1990 = vmatpush1.bf16.msra.mxu0 0
    %1991 = vmatprep.subr.bf16.mxu0 0
    %1992 = vmatpush1.bf16.msra.mxu0 0
    %1993 = vmatprep.subr.bf16.mxu0 0
    %1994 = vmatpush1.bf16.msra.mxu0 0
    %1995 = vmatprep.subr.bf16.mxu0 0
    %1996 = vmatpush1.bf16.msra.mxu0 0
    %1997 = vmatprep.subr.bf16.mxu0 0
    %1998 = vmatpush1.bf16.msra.mxu0 0
    %1999 = vmatprep.mubr.bf16.mxu0 0
    %2000 = vmatmul.mubr.bf16.gmra.mrb[0].mxu0 %v1961
    %v2001 = vpop.f32.mrb[0].mxu0
    %v2002 = vadd.f32 0.0, %v2001
    %v2003 = vpop.f32.mrb[0].mxu0
    %v2004 = vpop.f32.mrb[0].mxu0
    %v2005 = vpop.f32.mrb[0].mxu0
    %2006 = vdwg.mxu0
    %v2008 = vsel %vm1719, %v1949, 0
    %v2011 = vsel %vm1963, %v1116, 0
    %2013 = vmatprep.subr.bf16.mxu0 0
    %2014 = vmatpush1.bf16.msra.mxu0 %v2011
    %2015 = vmatprep.subr.bf16.mxu0 0
    %2016 = vmatpush1.bf16.msra.mxu0 0
    %2017 = vmatprep.subr.bf16.mxu0 0
    %2018 = vmatpush1.bf16.msra.mxu0 0
    %2019 = vmatprep.subr.bf16.mxu0 0
    %2020 = vmatpush1.bf16.msra.mxu0 0
    %2021 = vmatprep.subr.bf16.mxu0 0
    %2022 = vmatpush1.bf16.msra.mxu0 0
    %2023 = vmatprep.subr.bf16.mxu0 0
    %2024 = vmatpush1.bf16.msra.mxu0 0
    %2025 = vmatprep.subr.bf16.mxu0 0
    %2026 = vmatpush1.bf16.msra.mxu0 0
    %2027 = vmatprep.subr.bf16.mxu0 0
    %2028 = vmatpush1.bf16.msra.mxu0 0
    %2029 = vmatprep.subr.bf16.mxu0 0
    %2030 = vmatpush1.bf16.msra.mxu0 0
    %2031 = vmatprep.subr.bf16.mxu0 0
    %2032 = vmatpush1.bf16.msra.mxu0 0
    %2033 = vmatprep.subr.bf16.mxu0 0
    %2034 = vmatpush1.bf16.msra.mxu0 0
    %2035 = vmatprep.subr.bf16.mxu0 0
    %2036 = vmatpush1.bf16.msra.mxu0 0
    %2037 = vmatprep.subr.bf16.mxu0 0
    %2038 = vmatpush1.bf16.msra.mxu0 0
    %2039 = vmatprep.subr.bf16.mxu0 0
    %2040 = vmatpush1.bf16.msra.mxu0 0
    %2041 = vmatprep.subr.bf16.mxu0 0
    %2042 = vmatpush1.bf16.msra.mxu0 0
    %2043 = vmatprep.subr.bf16.mxu0 0
    %2044 = vmatpush1.bf16.msra.mxu0 0
    %2045 = vmatprep.mubr.bf16.mxu0 0
    %2046 = vmatmul.mubr.bf16.gmra.mrb[0].mxu0 %v2008
    %v2047 = vpop.f32.mrb[0].mxu0
    %v2048 = vadd.f32 0.0, %v2047
    %v2049 = vpop.f32.mrb[0].mxu0
    %v2050 = vpop.f32.mrb[0].mxu0
    %v2051 = vpop.f32.mrb[0].mxu0
    %2052 = vdwg.mxu0
    %v2054 = vsel %vm1719, %v1950, 0
    %v2057 = vsel %vm1963, %v1119, 0
    %2059 = vmatprep.subr.bf16.mxu0 0
    %2060 = vmatpush1.bf16.msra.mxu0 %v2057
    %2061 = vmatprep.subr.bf16.mxu0 0
    %2062 = vmatpush1.bf16.msra.mxu0 0
    %2063 = vmatprep.subr.bf16.mxu0 0
    %2064 = vmatpush1.bf16.msra.mxu0 0
    %2065 = vmatprep.subr.bf16.mxu0 0
    %2066 = vmatpush1.bf16.msra.mxu0 0
    %2067 = vmatprep.subr.bf16.mxu0 0
    %2068 = vmatpush1.bf16.msra.mxu0 0
    %2069 = vmatprep.subr.bf16.mxu0 0
    %2070 = vmatpush1.bf16.msra.mxu0 0
    %2071 = vmatprep.subr.bf16.mxu0 0
    %2072 = vmatpush1.bf16.msra.mxu0 0
    %2073 = vmatprep.subr.bf16.mxu0 0
    %2074 = vmatpush1.bf16.msra.mxu0 0
    %2075 = vmatprep.subr.bf16.mxu0 0
    %2076 = vmatpush1.bf16.msra.mxu0 0
    %2077 = vmatprep.subr.bf16.mxu0 0
    %2078 = vmatpush1.bf16.msra.mxu0 0
    %2079 = vmatprep.subr.bf16.mxu0 0
    %2080 = vmatpush1.bf16.msra.mxu0 0
    %2081 = vmatprep.subr.bf16.mxu0 0
    %2082 = vmatpush1.bf16.msra.mxu0 0
    %2083 = vmatprep.subr.bf16.mxu0 0
    %2084 = vmatpush1.bf16.msra.mxu0 0
    %2085 = vmatprep.subr.bf16.mxu0 0
    %2086 = vmatpush1.bf16.msra.mxu0 0
    %2087 = vmatprep.subr.bf16.mxu0 0
    %2088 = vmatpush1.bf16.msra.mxu0 0
    %2089 = vmatprep.subr.bf16.mxu0 0
    %2090 = vmatpush1.bf16.msra.mxu0 0
    %2091 = vmatprep.mubr.bf16.mxu0 0
    %2092 = vmatmul.mubr.bf16.gmra.mrb[0].mxu0 %v2054
    %v2093 = vpop.f32.mrb[0].mxu0
    %v2094 = vadd.f32 0.0, %v2093
    %v2095 = vpop.f32.mrb[0].mxu0
    %v2096 = vpop.f32.mrb[0].mxu0
    %v2097 = vpop.f32.mrb[0].mxu0
    %2098 = vdwg.mxu0
    %v2100 = vsel %vm1719, %v1951, 0
    %v2103 = vsel %vm1963, %v1122, 0
    %2105 = vmatprep.subr.bf16.mxu0 0
    %2106 = vmatpush1.bf16.msra.mxu0 %v2103
    %2107 = vmatprep.subr.bf16.mxu0 0
    %2108 = vmatpush1.bf16.msra.mxu0 0
    %2109 = vmatprep.subr.bf16.mxu0 0
    %2110 = vmatpush1.bf16.msra.mxu0 0
    %2111 = vmatprep.subr.bf16.mxu0 0
    %2112 = vmatpush1.bf16.msra.mxu0 0
    %2113 = vmatprep.subr.bf16.mxu0 0
    %2114 = vmatpush1.bf16.msra.mxu0 0
    %2115 = vmatprep.subr.bf16.mxu0 0
    %2116 = vmatpush1.bf16.msra.mxu0 0
    %2117 = vmatprep.subr.bf16.mxu0 0
    %2118 = vmatpush1.bf16.msra.mxu0 0
    %2119 = vmatprep.subr.bf16.mxu0 0
    %2120 = vmatpush1.bf16.msra.mxu0 0
    %2121 = vmatprep.subr.bf16.mxu0 0
    %2122 = vmatpush1.bf16.msra.mxu0 0
    %2123 = vmatprep.subr.bf16.mxu0 0
    %2124 = vmatpush1.bf16.msra.mxu0 0
    %2125 = vmatprep.subr.bf16.mxu0 0
    %2126 = vmatpush1.bf16.msra.mxu0 0
    %2127 = vmatprep.subr.bf16.mxu0 0
    %2128 = vmatpush1.bf16.msra.mxu0 0
    %2129 = vmatprep.subr.bf16.mxu0 0
    %2130 = vmatpush1.bf16.msra.mxu0 0
    %2131 = vmatprep.subr.bf16.mxu0 0
    %2132 = vmatpush1.bf16.msra.mxu0 0
    %2133 = vmatprep.subr.bf16.mxu0 0
    %2134 = vmatpush1.bf16.msra.mxu0 0
    %2135 = vmatprep.subr.bf16.mxu0 0
    %2136 = vmatpush1.bf16.msra.mxu0 0
    %2137 = vmatprep.mubr.bf16.mxu0 0
    %2138 = vmatmul.mubr.bf16.gmra.mrb[0].mxu0 %v2100
    %v2139 = vpop.f32.mrb[0].mxu0
    %v2140 = vadd.f32 0.0, %v2139
    %v2141 = vpop.f32.mrb[0].mxu0
    %v2142 = vpop.f32.mrb[0].mxu0
    %v2143 = vpop.f32.mrb[0].mxu0
    %2144 = vdwg.mxu0
    %v2146 = vsel %vm1719, %v1952, 0
    %v2149 = vsel %vm1963, %v1125, 0
    %2151 = vmatprep.subr.bf16.mxu0 0
    %2152 = vmatpush1.bf16.msra.mxu0 %v2149
    %2153 = vmatprep.subr.bf16.mxu0 0
    %2154 = vmatpush1.bf16.msra.mxu0 0
    %2155 = vmatprep.subr.bf16.mxu0 0
    %2156 = vmatpush1.bf16.msra.mxu0 0
    %2157 = vmatprep.subr.bf16.mxu0 0
    %2158 = vmatpush1.bf16.msra.mxu0 0
    %2159 = vmatprep.subr.bf16.mxu0 0
    %2160 = vmatpush1.bf16.msra.mxu0 0
    %2161 = vmatprep.subr.bf16.mxu0 0
    %2162 = vmatpush1.bf16.msra.mxu0 0
    %2163 = vmatprep.subr.bf16.mxu0 0
    %2164 = vmatpush1.bf16.msra.mxu0 0
    %2165 = vmatprep.subr.bf16.mxu0 0
    %2166 = vmatpush1.bf16.msra.mxu0 0
    %2167 = vmatprep.subr.bf16.mxu0 0
    %2168 = vmatpush1.bf16.msra.mxu0 0
    %2169 = vmatprep.subr.bf16.mxu0 0
    %2170 = vmatpush1.bf16.msra.mxu0 0
    %2171 = vmatprep.subr.bf16.mxu0 0
    %2172 = vmatpush1.bf16.msra.mxu0 0
    %2173 = vmatprep.subr.bf16.mxu0 0
    %2174 = vmatpush1.bf16.msra.mxu0 0
    %2175 = vmatprep.subr.bf16.mxu0 0
    %2176 = vmatpush1.bf16.msra.mxu0 0
    %2177 = vmatprep.subr.bf16.mxu0 0
    %2178 = vmatpush1.bf16.msra.mxu0 0
    %2179 = vmatprep.subr.bf16.mxu0 0
    %2180 = vmatpush1.bf16.msra.mxu0 0
    %2181 = vmatprep.subr.bf16.mxu0 0
    %2182 = vmatpush1.bf16.msra.mxu0 0
    %2183 = vmatprep.mubr.bf16.mxu0 0
    %2184 = vmatmul.mubr.bf16.gmra.mrb[0].mxu0 %v2146
    %v2185 = vpop.f32.mrb[0].mxu0
    %v2186 = vadd.f32 0.0, %v2185
    %v2187 = vpop.f32.mrb[0].mxu0
    %v2188 = vpop.f32.mrb[0].mxu0
    %v2189 = vpop.f32.mrb[0].mxu0
    %2190 = vdwg.mxu0
    %v2192 = vsel %vm1719, %v1953, 0
    %v2195 = vsel %vm1963, %v1128, 0
    %2197 = vmatprep.subr.bf16.mxu0 0
    %2198 = vmatpush1.bf16.msra.mxu0 %v2195
    %2199 = vmatprep.subr.bf16.mxu0 0
    %2200 = vmatpush1.bf16.msra.mxu0 0
    %2201 = vmatprep.subr.bf16.mxu0 0
    %2202 = vmatpush1.bf16.msra.mxu0 0
    %2203 = vmatprep.subr.bf16.mxu0 0
    %2204 = vmatpush1.bf16.msra.mxu0 0
    %2205 = vmatprep.subr.bf16.mxu0 0
    %2206 = vmatpush1.bf16.msra.mxu0 0
    %2207 = vmatprep.subr.bf16.mxu0 0
    %2208 = vmatpush1.bf16.msra.mxu0 0
    %2209 = vmatprep.subr.bf16.mxu0 0
    %2210 = vmatpush1.bf16.msra.mxu0 0
    %2211 = vmatprep.subr.bf16.mxu0 0
    %2212 = vmatpush1.bf16.msra.mxu0 0
    %2213 = vmatprep.subr.bf16.mxu0 0
    %2214 = vmatpush1.bf16.msra.mxu0 0
    %2215 = vmatprep.subr.bf16.mxu0 0
    %2216 = vmatpush1.bf16.msra.mxu0 0
    %2217 = vmatprep.subr.bf16.mxu0 0
    %2218 = vmatpush1.bf16.msra.mxu0 0
    %2219 = vmatprep.subr.bf16.mxu0 0
    %2220 = vmatpush1.bf16.msra.mxu0 0
    %2221 = vmatprep.subr.bf16.mxu0 0
    %2222 = vmatpush1.bf16.msra.mxu0 0
    %2223 = vmatprep.subr.bf16.mxu0 0
    %2224 = vmatpush1.bf16.msra.mxu0 0
    %2225 = vmatprep.subr.bf16.mxu0 0
    %2226 = vmatpush1.bf16.msra.mxu0 0
    %2227 = vmatprep.subr.bf16.mxu0 0
    %2228 = vmatpush1.bf16.msra.mxu0 0
    %2229 = vmatprep.mubr.bf16.mxu0 0
    %2230 = vmatmul.mubr.bf16.gmra.mrb[0].mxu0 %v2192
    %v2231 = vpop.f32.mrb[0].mxu0
    %v2232 = vadd.f32 0.0, %v2231
    %v2233 = vpop.f32.mrb[0].mxu0
    %v2234 = vpop.f32.mrb[0].mxu0
    %v2235 = vpop.f32.mrb[0].mxu0
    %2236 = vdwg.mxu0
    %v2238 = vsel %vm1719, %v1954, 0
    %v2241 = vsel %vm1963, %v1131, 0
    %2243 = vmatprep.subr.bf16.mxu0 0
    %2244 = vmatpush1.bf16.msra.mxu0 %v2241
    %2245 = vmatprep.subr.bf16.mxu0 0
    %2246 = vmatpush1.bf16.msra.mxu0 0
    %2247 = vmatprep.subr.bf16.mxu0 0
    %2248 = vmatpush1.bf16.msra.mxu0 0
    %2249 = vmatprep.subr.bf16.mxu0 0
    %2250 = vmatpush1.bf16.msra.mxu0 0
    %2251 = vmatprep.subr.bf16.mxu0 0
    %2252 = vmatpush1.bf16.msra.mxu0 0
    %2253 = vmatprep.subr.bf16.mxu0 0
    %2254 = vmatpush1.bf16.msra.mxu0 0
    %2255 = vmatprep.subr.bf16.mxu0 0
    %2256 = vmatpush1.bf16.msra.mxu0 0
    %2257 = vmatprep.subr.bf16.mxu0 0
    %2258 = vmatpush1.bf16.msra.mxu0 0
    %2259 = vmatprep.subr.bf16.mxu0 0
    %2260 = vmatpush1.bf16.msra.mxu0 0
    %2261 = vmatprep.subr.bf16.mxu0 0
    %2262 = vmatpush1.bf16.msra.mxu0 0
    %2263 = vmatprep.subr.bf16.mxu0 0
    %2264 = vmatpush1.bf16.msra.mxu0 0
    %2265 = vmatprep.subr.bf16.mxu0 0
    %2266 = vmatpush1.bf16.msra.mxu0 0
    %2267 = vmatprep.subr.bf16.mxu0 0
    %2268 = vmatpush1.bf16.msra.mxu0 0
    %2269 = vmatprep.subr.bf16.mxu0 0
    %2270 = vmatpush1.bf16.msra.mxu0 0
    %2271 = vmatprep.subr.bf16.mxu0 0
    %2272 = vmatpush1.bf16.msra.mxu0 0
    %2273 = vmatprep.subr.bf16.mxu0 0
    %2274 = vmatpush1.bf16.msra.mxu0 0
    %2275 = vmatprep.mubr.bf16.mxu0 0
    %2276 = vmatmul.mubr.bf16.gmra.mrb[0].mxu0 %v2238
    %v2277 = vpop.f32.mrb[0].mxu0
    %v2278 = vadd.f32 0.0, %v2277
    %v2279 = vpop.f32.mrb[0].mxu0
    %v2280 = vpop.f32.mrb[0].mxu0
    %v2281 = vpop.f32.mrb[0].mxu0
    %2282 = vdwg.mxu0
    %v2284 = vsel %vm1719, %v1955, 0
    %v2287 = vsel %vm1963, %v1134, 0
    %2289 = vmatprep.subr.bf16.mxu0 0
    %2290 = vmatpush1.bf16.msra.mxu0 %v2287
    %2291 = vmatprep.subr.bf16.mxu0 0
    %2292 = vmatpush1.bf16.msra.mxu0 0
    %2293 = vmatprep.subr.bf16.mxu0 0
    %2294 = vmatpush1.bf16.msra.mxu0 0
    %2295 = vmatprep.subr.bf16.mxu0 0
    %2296 = vmatpush1.bf16.msra.mxu0 0
    %2297 = vmatprep.subr.bf16.mxu0 0
    %2298 = vmatpush1.bf16.msra.mxu0 0
    %2299 = vmatprep.subr.bf16.mxu0 0
    %2300 = vmatpush1.bf16.msra.mxu0 0
    %2301 = vmatprep.subr.bf16.mxu0 0
    %2302 = vmatpush1.bf16.msra.mxu0 0
    %2303 = vmatprep.subr.bf16.mxu0 0
    %2304 = vmatpush1.bf16.msra.mxu0 0
    %2305 = vmatprep.subr.bf16.mxu0 0
    %2306 = vmatpush1.bf16.msra.mxu0 0
    %2307 = vmatprep.subr.bf16.mxu0 0
    %2308 = vmatpush1.bf16.msra.mxu0 0
    %2309 = vmatprep.subr.bf16.mxu0 0
    %2310 = vmatpush1.bf16.msra.mxu0 0
    %2311 = vmatprep.subr.bf16.mxu0 0
    %2312 = vmatpush1.bf16.msra.mxu0 0
    %2313 = vmatprep.subr.bf16.mxu0 0
    %2314 = vmatpush1.bf16.msra.mxu0 0
    %2315 = vmatprep.subr.bf16.mxu0 0
    %2316 = vmatpush1.bf16.msra.mxu0 0
    %2317 = vmatprep.subr.bf16.mxu0 0
    %2318 = vmatpush1.bf16.msra.mxu0 0
    %2319 = vmatprep.subr.bf16.mxu0 0
    %2320 = vmatpush1.bf16.msra.mxu0 0
    %2321 = vmatprep.mubr.bf16.mxu0 0
    %2322 = vmatmul.mubr.bf16.gmra.mrb[0].mxu0 %v2284
    %v2323 = vpop.f32.mrb[0].mxu0
    %v2324 = vadd.f32 0.0, %v2323
    %v2325 = vpop.f32.mrb[0].mxu0
    %v2326 = vpop.f32.mrb[0].mxu0
    %v2327 = vpop.f32.mrb[0].mxu0
    %2328 = vdwg.mxu0
    %v2330 = vsel %vm1719, %v1956, 0
    %v2333 = vsel %vm1963, %v1137, 0
    %2335 = vmatprep.subr.bf16.mxu0 0
    %2336 = vmatpush1.bf16.msra.mxu0 %v2333
    %2337 = vmatprep.subr.bf16.mxu0 0
    %2338 = vmatpush1.bf16.msra.mxu0 0
    %2339 = vmatprep.subr.bf16.mxu0 0
    %2340 = vmatpush1.bf16.msra.mxu0 0
    %2341 = vmatprep.subr.bf16.mxu0 0
    %2342 = vmatpush1.bf16.msra.mxu0 0
    %2343 = vmatprep.subr.bf16.mxu0 0
    %2344 = vmatpush1.bf16.msra.mxu0 0
    %2345 = vmatprep.subr.bf16.mxu0 0
    %2346 = vmatpush1.bf16.msra.mxu0 0
    %2347 = vmatprep.subr.bf16.mxu0 0
    %2348 = vmatpush1.bf16.msra.mxu0 0
    %2349 = vmatprep.subr.bf16.mxu0 0
    %2350 = vmatpush1.bf16.msra.mxu0 0
    %2351 = vmatprep.subr.bf16.mxu0 0
    %2352 = vmatpush1.bf16.msra.mxu0 0
    %2353 = vmatprep.subr.bf16.mxu0 0
    %2354 = vmatpush1.bf16.msra.mxu0 0
    %2355 = vmatprep.subr.bf16.mxu0 0
    %2356 = vmatpush1.bf16.msra.mxu0 0
    %2357 = vmatprep.subr.bf16.mxu0 0
    %2358 = vmatpush1.bf16.msra.mxu0 0
    %2359 = vmatprep.subr.bf16.mxu0 0
    %2360 = vmatpush1.bf16.msra.mxu0 0
    %2361 = vmatprep.subr.bf16.mxu0 0
    %2362 = vmatpush1.bf16.msra.mxu0 0
    %2363 = vmatprep.subr.bf16.mxu0 0
    %2364 = vmatpush1.bf16.msra.mxu0 0
    %2365 = vmatprep.subr.bf16.mxu0 0
    %2366 = vmatpush1.bf16.msra.mxu0 0
    %2367 = vmatprep.mubr.bf16.mxu0 0
    %2368 = vmatmul.mubr.bf16.gmra.mrb[0].mxu0 %v2330
    %v2369 = vpop.f32.mrb[0].mxu0
    %v2370 = vadd.f32 0.0, %v2369
    %v2371 = vpop.f32.mrb[0].mxu0
    %v2372 = vpop.f32.mrb[0].mxu0
    %v2373 = vpop.f32.mrb[0].mxu0
    %2374 = vdwg.mxu0
    %v2376 = vsel %vm1719, %v1957, 0
    %v2379 = vsel %vm1963, %v1140, 0
    %2381 = vmatprep.subr.bf16.mxu0 0
    %2382 = vmatpush1.bf16.msra.mxu0 %v2379
    %2383 = vmatprep.subr.bf16.mxu0 0
    %2384 = vmatpush1.bf16.msra.mxu0 0
    %2385 = vmatprep.subr.bf16.mxu0 0
    %2386 = vmatpush1.bf16.msra.mxu0 0
    %2387 = vmatprep.subr.bf16.mxu0 0
    %2388 = vmatpush1.bf16.msra.mxu0 0
    %2389 = vmatprep.subr.bf16.mxu0 0
    %2390 = vmatpush1.bf16.msra.mxu0 0
    %2391 = vmatprep.subr.bf16.mxu0 0
    %2392 = vmatpush1.bf16.msra.mxu0 0
    %2393 = vmatprep.subr.bf16.mxu0 0
    %2394 = vmatpush1.bf16.msra.mxu0 0
    %2395 = vmatprep.subr.bf16.mxu0 0
    %2396 = vmatpush1.bf16.msra.mxu0 0
    %2397 = vmatprep.subr.bf16.mxu0 0
    %2398 = vmatpush1.bf16.msra.mxu0 0
    %2399 = vmatprep.subr.bf16.mxu0 0
    %2400 = vmatpush1.bf16.msra.mxu0 0
    %2401 = vmatprep.subr.bf16.mxu0 0
    %2402 = vmatpush1.bf16.msra.mxu0 0
    %2403 = vmatprep.subr.bf16.mxu0 0
    %2404 = vmatpush1.bf16.msra.mxu0 0
    %2405 = vmatprep.subr.bf16.mxu0 0
    %2406 = vmatpush1.bf16.msra.mxu0 0
    %2407 = vmatprep.subr.bf16.mxu0 0
    %2408 = vmatpush1.bf16.msra.mxu0 0
    %2409 = vmatprep.subr.bf16.mxu0 0
    %2410 = vmatpush1.bf16.msra.mxu0 0
    %2411 = vmatprep.subr.bf16.mxu0 0
    %2412 = vmatpush1.bf16.msra.mxu0 0
    %2413 = vmatprep.mubr.bf16.mxu0 0
    %2414 = vmatmul.mubr.bf16.gmra.mrb[0].mxu0 %v2376
    %v2415 = vpop.f32.mrb[0].mxu0
    %v2416 = vadd.f32 0.0, %v2415
    %v2417 = vpop.f32.mrb[0].mxu0
    %v2418 = vpop.f32.mrb[0].mxu0
    %v2419 = vpop.f32.mrb[0].mxu0
    %2420 = vdwg.mxu0
    %v2422 = vsel %vm1719, %v1958, 0
    %v2425 = vsel %vm1963, %v1143, 0
    %2427 = vmatprep.subr.bf16.mxu0 0
    %2428 = vmatpush1.bf16.msra.mxu0 %v2425
    %2429 = vmatprep.subr.bf16.mxu0 0
    %2430 = vmatpush1.bf16.msra.mxu0 0
    %2431 = vmatprep.subr.bf16.mxu0 0
    %2432 = vmatpush1.bf16.msra.mxu0 0
    %2433 = vmatprep.subr.bf16.mxu0 0
    %2434 = vmatpush1.bf16.msra.mxu0 0
    %2435 = vmatprep.subr.bf16.mxu0 0
    %2436 = vmatpush1.bf16.msra.mxu0 0
    %2437 = vmatprep.subr.bf16.mxu0 0
    %2438 = vmatpush1.bf16.msra.mxu0 0
    %2439 = vmatprep.subr.bf16.mxu0 0
    %2440 = vmatpush1.bf16.msra.mxu0 0
    %2441 = vmatprep.subr.bf16.mxu0 0
    %2442 = vmatpush1.bf16.msra.mxu0 0
    %2443 = vmatprep.subr.bf16.mxu0 0
    %2444 = vmatpush1.bf16.msra.mxu0 0
    %2445 = vmatprep.subr.bf16.mxu0 0
    %2446 = vmatpush1.bf16.msra.mxu0 0
    %2447 = vmatprep.subr.bf16.mxu0 0
    %2448 = vmatpush1.bf16.msra.mxu0 0
    %2449 = vmatprep.subr.bf16.mxu0 0
    %2450 = vmatpush1.bf16.msra.mxu0 0
    %2451 = vmatprep.subr.bf16.mxu0 0
    %2452 = vmatpush1.bf16.msra.mxu0 0
    %2453 = vmatprep.subr.bf16.mxu0 0
    %2454 = vmatpush1.bf16.msra.mxu0 0
    %2455 = vmatprep.subr.bf16.mxu0 0
    %2456 = vmatpush1.bf16.msra.mxu0 0
    %2457 = vmatprep.subr.bf16.mxu0 0
    %2458 = vmatpush1.bf16.msra.mxu0 0
    %2459 = vmatprep.mubr.bf16.mxu0 0
    %2460 = vmatmul.mubr.bf16.gmra.mrb[0].mxu0 %v2422
    %v2461 = vpop.f32.mrb[0].mxu0
    %v2462 = vadd.f32 0.0, %v2461
    %v2463 = vpop.f32.mrb[0].mxu0
    %v2464 = vpop.f32.mrb[0].mxu0
    %v2465 = vpop.f32.mrb[0].mxu0
    %2466 = vdwg.mxu0
    %v2468 = vsel %vm1719, %v1959, 0
    %v2471 = vsel %vm1963, %v1146, 0
    %2473 = vmatprep.subr.bf16.mxu0 0
    %2474 = vmatpush1.bf16.msra.mxu0 %v2471
    %2475 = vmatprep.subr.bf16.mxu0 0
    %2476 = vmatpush1.bf16.msra.mxu0 0
    %2477 = vmatprep.subr.bf16.mxu0 0
    %2478 = vmatpush1.bf16.msra.mxu0 0
    %2479 = vmatprep.subr.bf16.mxu0 0
    %2480 = vmatpush1.bf16.msra.mxu0 0
    %2481 = vmatprep.subr.bf16.mxu0 0
    %2482 = vmatpush1.bf16.msra.mxu0 0
    %2483 = vmatprep.subr.bf16.mxu0 0
    %2484 = vmatpush1.bf16.msra.mxu0 0
    %2485 = vmatprep.subr.bf16.mxu0 0
    %2486 = vmatpush1.bf16.msra.mxu0 0
    %2487 = vmatprep.subr.bf16.mxu0 0
    %2488 = vmatpush1.bf16.msra.mxu0 0
    %2489 = vmatprep.subr.bf16.mxu0 0
    %2490 = vmatpush1.bf16.msra.mxu0 0
    %2491 = vmatprep.subr.bf16.mxu0 0
    %2492 = vmatpush1.bf16.msra.mxu0 0
    %2493 = vmatprep.subr.bf16.mxu0 0
    %2494 = vmatpush1.bf16.msra.mxu0 0
    %2495 = vmatprep.subr.bf16.mxu0 0
    %2496 = vmatpush1.bf16.msra.mxu0 0
    %2497 = vmatprep.subr.bf16.mxu0 0
    %2498 = vmatpush1.bf16.msra.mxu0 0
    %2499 = vmatprep.subr.bf16.mxu0 0
    %2500 = vmatpush1.bf16.msra.mxu0 0
    %2501 = vmatprep.subr.bf16.mxu0 0
    %2502 = vmatpush1.bf16.msra.mxu0 0
    %2503 = vmatprep.subr.bf16.mxu0 0
    %2504 = vmatpush1.bf16.msra.mxu0 0
    %2505 = vmatprep.mubr.bf16.mxu0 0
    %2506 = vmatmul.mubr.bf16.gmra.mrb[0].mxu0 %v2468
    %v2507 = vpop.f32.mrb[0].mxu0
    %v2508 = vadd.f32 0.0, %v2507
    %v2509 = vpop.f32.mrb[0].mxu0
    %v2510 = vpop.f32.mrb[0].mxu0
    %v2511 = vpop.f32.mrb[0].mxu0
    %2512 = vdwg.mxu0
    %v2513 = vpack.c.bf16 %v2002, %v2002
    %v2514 = vpack.c.bf16 %v2048, %v2048
    %v2515 = vpack.c.bf16 %v2186, %v2186
    %v2516 = vpack.c.bf16 %v2232, %v2232
    %v2517 = vpack.c.bf16 %v2278, %v2278
    %v2518 = vpack.c.bf16 %v2324, %v2324
    %v2519 = vpack.c.bf16 %v2462, %v2462
    %v2520 = vpack.c.bf16 %v2508, %v2508
    %v2521 = vcombine.low %v2513, %v2515
    %v2523 = vunpack.c.l.s4 1983009808
    %v2524 = vunpack.c.0.s8 %v2523
    %v2525 = vlaneseq
    %v2526 = vshrl.u32 %v2525, 7
    %v2527 = vsub.s32 %v2524, %v2526
    %v2528 = vrot.slane %v2521, %v2527
    %v2529 = vpack.c.bf16 %v2094, %v2094
    %v2531 = vunpack.c.l.s4 1983009808
    %v2532 = vunpack.c.0.s8 %v2531
    %v2533 = vlaneseq
    %v2534 = vshrl.u32 %v2533, 7
    %v2535 = vsub.s32 %v2532, %v2534
    %v2536 = vrot.slane %v2529, %v2535
    %v2537 = vcombine.low %v2528, %v2536
    %v2538 = vcombine.high %v2528, %v2536
    %v2540 = vunpack.c.l.s4 1934713408
    %v2541 = vunpack.c.0.s8 %v2540
    %v2542 = vlaneseq
    %v2543 = vshrl.u32 %v2542, 7
    %v2544 = vsub.s32 %v2541, %v2543
    %v2545 = vrot.slane %v2537, %v2544
    %v2547 = vunpack.c.l.s4 1934713408
    %v2548 = vunpack.c.0.s8 %v2547
    %v2549 = vlaneseq
    %v2550 = vshrl.u32 %v2549, 7
    %v2551 = vsub.s32 %v2548, %v2550
    %v2552 = vrot.slane %v2538, %v2551
    %v2553 = vcombine.high %v2545, 0
    %v2554 = vcombine.high %v2552, 0
    %v2555 = vcombine.low %v2514, %v2516
    %v2557 = vunpack.c.l.s4 1983009808
    %v2558 = vunpack.c.0.s8 %v2557
    %v2559 = vlaneseq
    %v2560 = vshrl.u32 %v2559, 7
    %v2561 = vsub.s32 %v2558, %v2560
    %v2562 = vrot.slane %v2555, %v2561
    %v2563 = vpack.c.bf16 %v2140, %v2140
    %v2565 = vunpack.c.l.s4 1983009808
    %v2566 = vunpack.c.0.s8 %v2565
    %v2567 = vlaneseq
    %v2568 = vshrl.u32 %v2567, 7
    %v2569 = vsub.s32 %v2566, %v2568
    %v2570 = vrot.slane %v2563, %v2569
    %v2571 = vcombine.low %v2562, %v2570
    %v2572 = vcombine.high %v2562, %v2570
    %v2574 = vunpack.c.l.s4 1934713408
    %v2575 = vunpack.c.0.s8 %v2574
    %v2576 = vlaneseq
    %v2577 = vshrl.u32 %v2576, 7
    %v2578 = vsub.s32 %v2575, %v2577
    %v2579 = vrot.slane %v2571, %v2578
    %v2581 = vunpack.c.l.s4 1934713408
    %v2582 = vunpack.c.0.s8 %v2581
    %v2583 = vlaneseq
    %v2584 = vshrl.u32 %v2583, 7
    %v2585 = vsub.s32 %v2582, %v2584
    %v2586 = vrot.slane %v2572, %v2585
    %v2587 = vcombine.high %v2579, 0
    %v2588 = vcombine.high %v2586, 0
    %v2589 = vcombine.low %v2517, %v2519
    %v2591 = vunpack.c.l.s4 1983009808
    %v2592 = vunpack.c.0.s8 %v2591
    %v2593 = vlaneseq
    %v2594 = vshrl.u32 %v2593, 7
    %v2595 = vsub.s32 %v2592, %v2594
    %v2596 = vrot.slane %v2589, %v2595
    %v2597 = vpack.c.bf16 %v2370, %v2370
    %v2599 = vunpack.c.l.s4 1983009808
    %v2600 = vunpack.c.0.s8 %v2599
    %v2601 = vlaneseq
    %v2602 = vshrl.u32 %v2601, 7
    %v2603 = vsub.s32 %v2600, %v2602
    %v2604 = vrot.slane %v2597, %v2603
    %v2605 = vcombine.low %v2596, %v2604
    %v2606 = vcombine.high %v2596, %v2604
    %v2608 = vunpack.c.l.s4 1934713408
    %v2609 = vunpack.c.0.s8 %v2608
    %v2610 = vlaneseq
    %v2611 = vshrl.u32 %v2610, 7
    %v2612 = vsub.s32 %v2609, %v2611
    %v2613 = vrot.slane %v2605, %v2612
    %v2615 = vunpack.c.l.s4 1934713408
    %v2616 = vunpack.c.0.s8 %v2615
    %v2617 = vlaneseq
    %v2618 = vshrl.u32 %v2617, 7
    %v2619 = vsub.s32 %v2616, %v2618
    %v2620 = vrot.slane %v2606, %v2619
    %v2621 = vcombine.high %v2613, 0
    %v2622 = vcombine.high %v2620, 0
    %v2623 = vcombine.low %v2518, %v2520
    %v2625 = vunpack.c.l.s4 1983009808
    %v2626 = vunpack.c.0.s8 %v2625
    %v2627 = vlaneseq
    %v2628 = vshrl.u32 %v2627, 7
    %v2629 = vsub.s32 %v2626, %v2628
    %v2630 = vrot.slane %v2623, %v2629
    %v2631 = vpack.c.bf16 %v2416, %v2416
    %v2633 = vunpack.c.l.s4 1983009808
    %v2634 = vunpack.c.0.s8 %v2633
    %v2635 = vlaneseq
    %v2636 = vshrl.u32 %v2635, 7
    %v2637 = vsub.s32 %v2634, %v2636
    %v2638 = vrot.slane %v2631, %v2637
    %v2639 = vcombine.low %v2630, %v2638
    %v2640 = vcombine.high %v2630, %v2638
    %v2642 = vunpack.c.l.s4 1934713408
    %v2643 = vunpack.c.0.s8 %v2642
    %v2644 = vlaneseq
    %v2645 = vshrl.u32 %v2644, 7
    %v2646 = vsub.s32 %v2643, %v2645
    %v2647 = vrot.slane %v2639, %v2646
    %v2649 = vunpack.c.l.s4 1934713408
    %v2650 = vunpack.c.0.s8 %v2649
    %v2651 = vlaneseq
    %v2652 = vshrl.u32 %v2651, 7
    %v2653 = vsub.s32 %v2650, %v2652
    %v2654 = vrot.slane %v2640, %v2653
    %v2655 = vcombine.high %v2647, 0
    %v2656 = vcombine.high %v2654, 0
    %v2659 = vpack.i.b16 %v2579, %v2545
    %v2661 = vshrl.u32 %v2545, 16
    %v2662 = vshrl.u32 %v2579, 16
    %v2663 = vpack.i.b16 %v2662, %v2661
    %v2667 = vpack.i.b16 %v2587, %v2553
    %v2669 = vshrl.u32 %v2553, 16
    %v2670 = vshrl.u32 %v2587, 16
    %v2671 = vpack.i.b16 %v2670, %v2669
    %v2675 = vpack.i.b16 %v2586, %v2552
    %v2677 = vshrl.u32 %v2552, 16
    %v2678 = vshrl.u32 %v2586, 16
    %v2679 = vpack.i.b16 %v2678, %v2677
    %v2683 = vpack.i.b16 %v2588, %v2554
    %v2685 = vshrl.u32 %v2554, 16
    %v2686 = vshrl.u32 %v2588, 16
    %v2687 = vpack.i.b16 %v2686, %v2685
    %v2691 = vpack.i.b16 %v2647, %v2613
    %v2693 = vshrl.u32 %v2613, 16
    %v2694 = vshrl.u32 %v2647, 16
    %v2695 = vpack.i.b16 %v2694, %v2693
    %v2699 = vpack.i.b16 %v2655, %v2621
    %v2701 = vshrl.u32 %v2621, 16
    %v2702 = vshrl.u32 %v2655, 16
    %v2703 = vpack.i.b16 %v2702, %v2701
    %v2707 = vpack.i.b16 %v2654, %v2620
    %v2709 = vshrl.u32 %v2620, 16
    %v2710 = vshrl.u32 %v2654, 16
    %v2711 = vpack.i.b16 %v2710, %v2709
    %v2715 = vpack.i.b16 %v2656, %v2622
    %v2717 = vshrl.u32 %v2622, 16
    %v2718 = vshrl.u32 %v2656, 16
    %v2719 = vpack.i.b16 %v2718, %v2717
    %v2721 = vcombine.low %v2659, %v2675
    %v2723 = vunpack.c.l.s4 1983009808
    %v2724 = vunpack.c.0.s8 %v2723
    %v2725 = vlaneseq
    %v2726 = vshrl.u32 %v2725, 7
    %v2727 = vsub.s32 %v2724, %v2726
    %v2728 = vrot.slane %v2721, %v2727
    %v2729 = vcombine.low %v2667, %v2683
    %v2731 = vunpack.c.l.s4 1983009808
    %v2732 = vunpack.c.0.s8 %v2731
    %v2733 = vlaneseq
    %v2734 = vshrl.u32 %v2733, 7
    %v2735 = vsub.s32 %v2732, %v2734
    %v2736 = vrot.slane %v2729, %v2735
    %v2737 = vcombine.low %v2691, %v2707
    %v2739 = vunpack.c.l.s4 1983009808
    %v2740 = vunpack.c.0.s8 %v2739
    %v2741 = vlaneseq
    %v2742 = vshrl.u32 %v2741, 7
    %v2743 = vsub.s32 %v2740, %v2742
    %v2744 = vrot.slane %v2737, %v2743
    %v2745 = vcombine.low %v2699, %v2715
    %v2747 = vunpack.c.l.s4 1983009808
    %v2748 = vunpack.c.0.s8 %v2747
    %v2749 = vlaneseq
    %v2750 = vshrl.u32 %v2749, 7
    %v2751 = vsub.s32 %v2748, %v2750
    %v2752 = vrot.slane %v2745, %v2751
    %v2753 = vcombine.low %v2728, %v2736
    %v2754 = vcombine.high %v2728, %v2736
    %v2756 = vunpack.c.l.s4 1934713408
    %v2757 = vunpack.c.0.s8 %v2756
    %v2758 = vlaneseq
    %v2759 = vshrl.u32 %v2758, 7
    %v2760 = vsub.s32 %v2757, %v2759
    %v2761 = vrot.slane %v2753, %v2760
    %v2763 = vunpack.c.l.s4 1934713408
    %v2764 = vunpack.c.0.s8 %v2763
    %v2765 = vlaneseq
    %v2766 = vshrl.u32 %v2765, 7
    %v2767 = vsub.s32 %v2764, %v2766
    %v2768 = vrot.slane %v2754, %v2767
    %v2769 = vcombine.low %v2744, %v2752
    %v2770 = vcombine.high %v2744, %v2752
    %v2772 = vunpack.c.l.s4 1934713408
    %v2773 = vunpack.c.0.s8 %v2772
    %v2774 = vlaneseq
    %v2775 = vshrl.u32 %v2774, 7
    %v2776 = vsub.s32 %v2773, %v2775
    %v2777 = vrot.slane %v2769, %v2776
    %v2779 = vunpack.c.l.s4 1934713408
    %v2780 = vunpack.c.0.s8 %v2779
    %v2781 = vlaneseq
    %v2782 = vshrl.u32 %v2781, 7
    %v2783 = vsub.s32 %v2780, %v2782
    %v2784 = vrot.slane %v2770, %v2783
    %v2785 = vcombine.low %v2761, %v2777
    %v2786 = vcombine.high %v2761, %v2777
    %v2787 = vcombine.low %v2768, %v2784
    %v2788 = vcombine.low %v2663, %v2679
    %v2790 = vunpack.c.l.s4 1983009808
    %v2791 = vunpack.c.0.s8 %v2790
    %v2792 = vlaneseq
    %v2793 = vshrl.u32 %v2792, 7
    %v2794 = vsub.s32 %v2791, %v2793
    %v2795 = vrot.slane %v2788, %v2794
    %v2796 = vcombine.low %v2671, %v2687
    %v2798 = vunpack.c.l.s4 1983009808
    %v2799 = vunpack.c.0.s8 %v2798
    %v2800 = vlaneseq
    %v2801 = vshrl.u32 %v2800, 7
    %v2802 = vsub.s32 %v2799, %v2801
    %v2803 = vrot.slane %v2796, %v2802
    %v2804 = vcombine.low %v2695, %v2711
    %v2806 = vunpack.c.l.s4 1983009808
    %v2807 = vunpack.c.0.s8 %v2806
    %v2808 = vlaneseq
    %v2809 = vshrl.u32 %v2808, 7
    %v2810 = vsub.s32 %v2807, %v2809
    %v2811 = vrot.slane %v2804, %v2810
    %v2812 = vcombine.low %v2703, %v2719
    %v2814 = vunpack.c.l.s4 1983009808
    %v2815 = vunpack.c.0.s8 %v2814
    %v2816 = vlaneseq
    %v2817 = vshrl.u32 %v2816, 7
    %v2818 = vsub.s32 %v2815, %v2817
    %v2819 = vrot.slane %v2812, %v2818
    %v2820 = vcombine.low %v2795, %v2803
    %v2821 = vcombine.high %v2795, %v2803
    %v2823 = vunpack.c.l.s4 1934713408
    %v2824 = vunpack.c.0.s8 %v2823
    %v2825 = vlaneseq
    %v2826 = vshrl.u32 %v2825, 7
    %v2827 = vsub.s32 %v2824, %v2826
    %v2828 = vrot.slane %v2820, %v2827
    %v2830 = vunpack.c.l.s4 1934713408
    %v2831 = vunpack.c.0.s8 %v2830
    %v2832 = vlaneseq
    %v2833 = vshrl.u32 %v2832, 7
    %v2834 = vsub.s32 %v2831, %v2833
    %v2835 = vrot.slane %v2821, %v2834
    %v2836 = vcombine.low %v2811, %v2819
    %v2837 = vcombine.high %v2811, %v2819
    %v2839 = vunpack.c.l.s4 1934713408
    %v2840 = vunpack.c.0.s8 %v2839
    %v2841 = vlaneseq
    %v2842 = vshrl.u32 %v2841, 7
    %v2843 = vsub.s32 %v2840, %v2842
    %v2844 = vrot.slane %v2836, %v2843
    %v2846 = vunpack.c.l.s4 1934713408
    %v2847 = vunpack.c.0.s8 %v2846
    %v2848 = vlaneseq
    %v2849 = vshrl.u32 %v2848, 7
    %v2850 = vsub.s32 %v2847, %v2849
    %v2851 = vrot.slane %v2837, %v2850
    %v2852 = vcombine.low %v2828, %v2844
    %v2853 = vcombine.high %v2828, %v2844
    %v2854 = vcombine.low %v2835, %v2851
    %v2857 = vpack.i.b16 %v2852, %v2785
    %v2858 = vshrl.u32 %v2785, 16
    %v2859 = vshrl.u32 %v2852, 16
    %v2860 = vpack.i.b16 %v2859, %v2858
    %v2863 = vpack.i.b16 %v2853, %v2786
    %v2864 = vshrl.u32 %v2786, 16
    %v2865 = vshrl.u32 %v2853, 16
    %v2866 = vpack.i.b16 %v2865, %v2864
    %v2869 = vpack.i.b16 %v2854, %v2787
    %v2870 = vshrl.u32 %v2787, 16
    %v2871 = vshrl.u32 %v2854, 16
    %v2872 = vpack.i.b16 %v2871, %v2870
    %2873 = vrot.lane.b32.xlu0 %v2860, 5
    %v2874 = vpop.permute.xlu0 %2873
    %2875 = vrot.lane.b32.xlu0 %v2863, 10
    %v2876 = vpop.permute.xlu0 %2875
    %2877 = vrot.lane.b32.xlu0 %v2866, 15
    %v2878 = vpop.permute.xlu0 %2877
    %2879 = vrot.lane.b32.xlu0 %v2869, 20
    %v2880 = vpop.permute.xlu0 %2879
    %2881 = vrot.lane.b32.xlu0 %v2872, 25
    %v2882 = vpop.permute.xlu0 %2881
    %v2885 = vsel %vm1152, %v2857, %v2874
    %vm2886 = vcmask 80896
    %v2888 = vsel %vm2886, %v2885, %v2876
    %vm2889 = vcmask 121856
    %v2891 = vsel %vm2889, %v2888, %v2878
    %vm2892 = vcmask 162816
    %v2894 = vsel %vm2892, %v2891, %v2880
    %vm2895 = vcmask 203776
    %v2897 = vsel %vm2895, %v2894, %v2882
    %v2898 = vld [vmem:[#allocation7] sm:$0xf]
    %v2899 = vld [vmem:[#allocation7 + $0x4] sm:$0xf]
    %v2900 = vld [vmem:[#allocation7 + $0x8] sm:$0xf]
    %v2901 = vld [vmem:[#allocation7 + $0xc] sm:$0x7]
    %v2902 = vld [vmem:[%s3] sm:$0x1]
    %v2904 = vlaneseq
    %v2905 = vshrl.u32 %v2904, 7
    %v2906 = vsub.s32 0, %v2905
    %v2907 = vrot.slane %v2902, %v2906
    %v2913 = vunpack.c.l.b16 %v2898
    %v2914 = vunpack.c.l.b16 %v2899
    %v2915 = vunpack.c.l.b16 %v2900
    %v2916 = vunpack.c.l.b16 %v2901
    %v2917 = vpack.c.b16 %v2914, %v2913
    %v2918 = vpack.c.b16 %v2916, %v2915
    %v2920 = vsel %vm78, %v2897, 0
    %v2923 = vsel %vm82, %v2918, 0
    %2925 = vmatprep.subr.bf16.mxu0 0
    %2926 = vmatpush1.bf16.msra.mxu0 %v2917
    %2927 = vmatprep.subr.bf16.mxu0 0
    %2928 = vmatpush1.bf16.msra.mxu0 %v2923
    %2929 = vmatprep.subr.bf16.mxu0 0
    %2930 = vmatpush1.bf16.msra.mxu0 0
    %2931 = vmatprep.subr.bf16.mxu0 0
    %2932 = vmatpush1.bf16.msra.mxu0 0
    %2933 = vmatprep.subr.bf16.mxu0 0
    %2934 = vmatpush1.bf16.msra.mxu0 0
    %2935 = vmatprep.subr.bf16.mxu0 0
    %2936 = vmatpush1.bf16.msra.mxu0 0
    %2937 = vmatprep.subr.bf16.mxu0 0
    %2938 = vmatpush1.bf16.msra.mxu0 0
    %2939 = vmatprep.subr.bf16.mxu0 0
    %2940 = vmatpush1.bf16.msra.mxu0 0
    %2941 = vmatprep.subr.bf16.mxu0 0
    %2942 = vmatpush1.bf16.msra.mxu0 0
    %2943 = vmatprep.subr.bf16.mxu0 0
    %2944 = vmatpush1.bf16.msra.mxu0 0
    %2945 = vmatprep.subr.bf16.mxu0 0
    %2946 = vmatpush1.bf16.msra.mxu0 0
    %2947 = vmatprep.subr.bf16.mxu0 0
    %2948 = vmatpush1.bf16.msra.mxu0 0
    %2949 = vmatprep.subr.bf16.mxu0 0
    %2950 = vmatpush1.bf16.msra.mxu0 0
    %2951 = vmatprep.subr.bf16.mxu0 0
    %2952 = vmatpush1.bf16.msra.mxu0 0
    %2953 = vmatprep.subr.bf16.mxu0 0
    %2954 = vmatpush1.bf16.msra.mxu0 0
    %2955 = vmatprep.subr.bf16.mxu0 0
    %2956 = vmatpush1.bf16.msra.mxu0 0
    %2957 = vmatprep.mubr.bf16.mxu0 0
    %2958 = vmatmul.mubr.bf16.gmra.mrb[0].mxu0 %v2920
    %v2959 = vpop.f32.mrb[0].mxu0
    %v2960 = vadd.f32 %v2907, %v2959
    %v2961 = vpop.f32.mrb[0].mxu0
    %v2962 = vpop.f32.mrb[0].mxu0
    %v2963 = vadd.f32 %v2907, %v2962
    %v2964 = vpop.f32.mrb[0].mxu0
    %2965 = vdwg.mxu0
    %2966 = vst.msk [vmem:[#allocation8] sm:$0xff] %vm78, %v2960
    %2967 = vst.msk [vmem:[#allocation8 + $0x8] sm:$0xff] %vm78, %v2963
    // Predicated region
    $region30: #{tpu_custom_call.1} parent=1 // pred_check
      _
    $region31: #{tpu_custom_call.1} parent=1 // pred_check_branch
      %2969 = sbr.rel (0) target = $region33
    $region32: #{tpu_custom_call.1} parent=1 // pred_region
      %s2971 = ssub.s32 256, 256
      %2972 = vsyncadd [#allocation4], %s2971
      %s2973 = sshll.u32 [#allocation8], 4
      %s2974 = int_to_ptr.vmem [resolvable:$true] %s2973
      %2979 = dma.vmem_to_hbm [thread:$0]  %s2974, 256, %s4, [#allocation4], 128, 128, 8
    $region33: #{tpu_custom_call.1} parent=1 // pred_fallthru
      _
    // Predicated region
    $region34: #{tpu_custom_call.1} parent=1 // pred_check
      _
    $region35: #{tpu_custom_call.1} parent=1 // pred_check_branch
      %2981 = sbr.rel (0) target = $region37
    $region36: #{tpu_custom_call.1} parent=1 // pred_region
      %2982 = dma.done [#allocation4], 256
    $region37: #{tpu_custom_call.1} parent=1 // pred_fallthru
      _
    %2983 = vsyncpa [#allocation3], 1
    %2984 = vsyncpa [#allocation6], 1
    %2985 = vsyncpa [#allocation4], 1

</llo_original>
